<compile_context>
chip_gen: v7x
topology: tpu7x:2x2x1
jax: 0.10.0
libtpu: 0.0.40
codegen_flags: <defaults>
</compile_context>

<pallas_src>
import functools

import jax
import jax.numpy as jnp
from jax.experimental import pallas as pl
from jax.experimental.pallas import tpu as pltpu


# ----------------------------------------------------------------------------
# Kernels (all shapes below are the row-folded shapes)
# ----------------------------------------------------------------------------
def _bond_ffn_gated_kernel(bond_ref, node_ref, time_ref,
                           wbg_ref, wng_ref, wgt_ref,
                           wm1_ref, bm1_ref, wm2_ref, bm2_ref,
                           bg1_ref, wg2_ref, bg2_ref,
                           out_ref):
    # Static split point between the bond/node_linear outputs and the gate
    # hidden contribution inside the packed dot results.
    ni = wm1_ref.shape[0]                      # fold * inter_dim

    bond = bond_ref[...]                       # [tm, fold*Db]
    node = node_ref[...]                       # [tm, fold*Dn]

    # One wide dot per activation: columns [:ni] are the (block-diag) linear,
    # columns [ni:] are that activation's contribution to the gate hidden.
    bf_g = jnp.dot(bond, wbg_ref[...], preferred_element_type=jnp.float32)
    nf_g = jnp.dot(node, wng_ref[...], preferred_element_type=jnp.float32)

    # inter_module: MLP(inter -> inter hidden -> out), ReLU, biases (f32).
    inter = bf_g[:, :ni] * nf_g[:, :ni]        # VPU, f32
    h = jnp.dot(inter, wm1_ref[...], preferred_element_type=jnp.float32) + bm1_ref[...]
    h = jnp.maximum(h, 0.0)
    inter_out = (jnp.dot(h, wm2_ref[...], preferred_element_type=jnp.float32)
                 + bm2_ref[...])

    # gate: MLP(Db+Dn+1 -> 32 -> out) on concat(bond, node, time), computed as
    # split matmuls so the concat never exists; the time term is a tiny
    # [tm, fold] @ [fold, fold*G] dot (kron-folded (1, G) weight).
    gh = (bf_g[:, ni:] + nf_g[:, ni:]
          + jnp.dot(time_ref[...], wgt_ref[...], preferred_element_type=jnp.float32)
          + bg1_ref[...])
    gh = jnp.maximum(gh, 0.0)
    gate = (jnp.dot(gh, wg2_ref[...], preferred_element_type=jnp.float32)
            + bg2_ref[...])

    out_ref[...] = (inter_out * jax.nn.sigmoid(gate)).astype(out_ref.dtype)


def _bond_ffn_nogate_kernel(bond_ref, node_ref,
                            wb_ref, wn_ref,
                            wm1_ref, bm1_ref, wm2_ref, bm2_ref,
                            out_ref):
    bf = jnp.dot(bond_ref[...], wb_ref[...], preferred_element_type=jnp.float32)
    nf = jnp.dot(node_ref[...], wn_ref[...], preferred_element_type=jnp.float32)
    inter = bf * nf
    h = jnp.dot(inter, wm1_ref[...], preferred_element_type=jnp.float32) + bm1_ref[...]
    h = jnp.maximum(h, 0.0)
    out = jnp.dot(h, wm2_ref[...], preferred_element_type=jnp.float32) + bm2_ref[...]
    out_ref[...] = out.astype(out_ref.dtype)


# ----------------------------------------------------------------------------
# Wrapper
# ----------------------------------------------------------------------------
def _kron_eye(w, fold):
    # kron(I_fold, w): block-diagonal with `fold` copies of w.  Tiny, built once.
    return w if fold == 1 else jnp.kron(jnp.eye(fold, dtype=w.dtype), w)


def _tile_bias(b, fold):
    return b if fold == 1 else jnp.tile(b, (1, fold))


def bond_ffn(bond_in, node_in, time, params, *, use_gate=True, tm=4096,
             fold=None, out_dtype=None):
    """BondFFN forward. bond_in: [N, Db], node_in: [N, Dn], time: [N, 1] -> [N, Do].

    tm:        row tile in *original* rows (default 4096 ~= 512 folded rows;
               sweep 1024..8192 — per-step VMEM stays tiny on all generations).
    fold:      rows folded into the lane dimension (auto: aim for ~128 lanes).
    out_dtype: output dtype (default bond_in.dtype; bf16 halves the write
               traffic on v7x if downstream tolerates it).
    """
    N, Db = bond_in.shape
    Dn = node_in.shape[-1]
    inter_dim = params["wm1"].shape[0]
    Do = params["wm2"].shape[-1]
    G = params["wg2"].shape[0] if use_gate else 0
    out_dtype = bond_in.dtype if out_dtype is None else out_dtype
    time = time.reshape(N, 1)

    if fold is None:
        dims = [Db, Dn, inter_dim, Do] + ([G] if use_gate else [])
        # Fill ~128 lanes on the narrowest activation, but keep the kron
        # weights small when some dim is already large.
        fold = max(1, min(128 // max(1, min(dims)), 512 // max(dims)))
    fold = int(fold)

    # N must be a multiple of `fold` for the free row-folding reshape; pad the
    # (at most fold-1) missing rows.  Row-tile raggedness is handled by the
    # grid's masked partial last block, NOT by padding to a tile multiple.
    n_pad = (-N) % fold
    if n_pad:
        bond_in = jnp.pad(bond_in, ((0, n_pad), (0, 0)))
        node_in = jnp.pad(node_in, ((0, n_pad), (0, 0)))
        time = jnp.pad(time, ((0, n_pad), (0, 0)))
    Nt = N + n_pad
    Nf = Nt // fold

    # Free contiguous-view reshapes: fold rows into lanes.
    bond_f = bond_in.reshape(Nf, fold * Db)
    node_f = node_in.reshape(Nf, fold * Dn)
    time_f = time.reshape(Nf, fold)

    # Folded row tile: multiple of 8 sublanes, clamped to the actual row count
    # (a block equal to the full row extent is always legal).
    tm_f = min(((max(1, tm // fold) + 7) // 8) * 8, Nf)
    grid = (pl.cdiv(Nf, tm_f),)

    # Fold weights once: kron(I_fold, W) block-diagonals, biases tiled.
    wbk = _kron_eye(params["wb"], fold)        # [fold*Db,    fold*inter]
    wnk = _kron_eye(params["wn"], fold)        # [fold*Dn,    fold*inter]
    wm1k = _kron_eye(params["wm1"], fold)      # [fold*inter, fold*inter]
    wm2k = _kron_eye(params["wm2"], fold)      # [fold*inter, fold*Do]
    bm1t = _tile_bias(params["bm1"], fold)     # [1, fold*inter]
    bm2t = _tile_bias(params["bm2"], fold)     # [1, fold*Do]

    row = lambda d: pl.BlockSpec((tm_f, d), lambda i: (i, 0))
    full = lambda a: pl.BlockSpec(a.shape, lambda i: (0, 0))

    if use_gate:
        wg1 = params["wg1"]                                # [Db+Dn+1, G]
        wg1bk = _kron_eye(wg1[:Db], fold)                  # [fold*Db, fold*G]
        wg1nk = _kron_eye(wg1[Db:Db + Dn], fold)           # [fold*Dn, fold*G]
        wgtk = _kron_eye(wg1[Db + Dn:], fold)              # [fold,    fold*G]
        bg1t = _tile_bias(params["bg1"], fold)             # [1, fold*G]
        wg2k = _kron_eye(params["wg2"], fold)              # [fold*G, fold*Do]
        bg2t = _tile_bias(params["bg2"], fold)             # [1, fold*Do]

        # Pack the two dots that share each activation side-by-side, so bond
        # and node each feed exactly one wide matmul.
        wbg = jnp.concatenate([wbk, wg1bk], axis=1)        # [fold*Db, fold*(inter+G)]
        wng = jnp.concatenate([wnk, wg1nk], axis=1)        # [fold*Dn, fold*(inter+G)]

        args = (bond_f, node_f, time_f,
                wbg, wng, wgtk, wm1k, bm1t, wm2k, bm2t, bg1t, wg2k, bg2t)
        in_specs = ([row(fold * Db), row(fold * Dn), row(fold)]
                    + [full(a) for a in args[3:]])
        kernel = _bond_ffn_gated_kernel
    else:
        args = (bond_f, node_f, wbk, wnk, wm1k, bm1t, wm2k, bm2t)
        in_specs = ([row(fold * Db), row(fold * Dn)]
                    + [full(a) for a in args[2:]])
        kernel = _bond_ffn_nogate_kernel

    out_f = pl.pallas_call(
        kernel,
        out_shape=jax.ShapeDtypeStruct((Nf, fold * Do), out_dtype),
        grid=grid,
        in_specs=in_specs,
        out_specs=pl.BlockSpec((tm_f, fold * Do), lambda i: (i, 0)),
        compiler_params=pltpu.CompilerParams(
            dimension_semantics=("parallel",)),
    )(*args)

    out = out_f.reshape(Nt, Do)                # free contiguous reshape back
    return out[:N] if n_pad else out


# ----------------------------------------------------------------------------
# Params + reference
# ----------------------------------------------------------------------------
def init_params(key, bond_dim, node_dim, inter_dim, out_dim, gate_hidden=32):
    ks = jax.random.split(key, 10)
    gate_in_dim = bond_dim + node_dim + 1
    s = lambda k, shp, fan_in: jax.random.uniform(
        k, shp, jnp.float32, -1.0, 1.0) / jnp.sqrt(fan_in)
    return {
        # weights stored as [in, out] (transposed vs. torch Linear.weight)
        "wb":  s(ks[0], (bond_dim, inter_dim), bond_dim),
        "wn":  s(ks[1], (node_dim, inter_dim), node_dim),
        "wm1": s(ks[2], (inter_dim, inter_dim), inter_dim),
        "bm1": s(ks[3], (1, inter_dim), inter_dim),
        "wm2": s(ks[4], (inter_dim, out_dim), inter_dim),
        "bm2": s(ks[5], (1, out_dim), inter_dim),
        "wg1": s(ks[6], (gate_in_dim, gate_hidden), gate_in_dim),
        "bg1": s(ks[7], (1, gate_hidden), gate_in_dim),
        "wg2": s(ks[8], (gate_hidden, out_dim), gate_hidden),
        "bg2": s(ks[9], (1, out_dim), gate_hidden),
    }


def bond_ffn_reference(bond_in, node_in, time, p, use_gate=True):
    # Exact-f32 ground truth (HIGHEST keeps XLA from demoting the f32 matmuls
    # to a single bf16 MXU pass at default precision).
    dot = functools.partial(jnp.dot, precision=jax.lax.Precision.HIGHEST)
    inter = dot(bond_in, p["wb"]) * dot(node_in, p["wn"])
    h = jnp.maximum(dot(inter, p["wm1"]) + p["bm1"], 0.0)
    out = dot(h, p["wm2"]) + p["bm2"]
    if use_gate:
        gi = jnp.concatenate([bond_in, node_in, time], axis=-1)
        gh = jnp.maximum(dot(gi, p["wg1"]) + p["bg1"], 0.0)
        out = out * jax.nn.sigmoid(dot(gh, p["wg2"]) + p["bg2"])
    return out


if __name__ == "__main__":
    # Small, fold- and tile-ragged N: exercises the fold pad (300 % 8 == 4)
    # and (with tm=128 below) a multi-step grid with a masked partial block.
    N, bond_dim, node_dim, inter_dim = 300, 16, 16, 32
    out_dim = bond_dim  # out_dim=None in __init__ -> bond_dim

    key = jax.random.PRNGKey(0)
    kp, kb, kn, kt = jax.random.split(key, 4)
    params = init_params(kp, bond_dim, node_dim, inter_dim, out_dim)
    bond_in = jax.random.normal(kb, (N, bond_dim), jnp.float32)
    node_in = jax.random.normal(kn, (N, node_dim), jnp.float32)
    time = jax.random.uniform(kt, (N, 1), jnp.float32)

    # Tolerance note: the reference runs at HIGHEST (exact f32) precision while
    # the in-kernel dots use the MXU's default f32 contraction; the tolerance
    # covers a possible reduced-precision contraction yet still catches any
    # structural / weight-packing error (those are O(0.1-1)).
    tol = dict(atol=2e-2, rtol=2e-2)

    ref = bond_ffn_reference(bond_in, node_in, time, params, use_gate=True)

    # Gated path, default row tile (single grid step at this tiny N).
    out = jax.block_until_ready(
        bond_ffn(bond_in, node_in, time, params, use_gate=True))
    assert out.shape == (N, out_dim)
    assert bool(jnp.allclose(out, ref, **tol)), "gated mismatch"

    # Gated path, small row tile -> multi-step grid with masked partial block.
    out_small = jax.block_until_ready(
        bond_ffn(bond_in, node_in, time, params, use_gate=True, tm=128))
    assert bool(jnp.allclose(out_small, ref, **tol)), "gated (tm=128) mismatch"

    # Ungated configuration (use_gate=False is a valid config of the module).
    ref_ng = bond_ffn_reference(bond_in, node_in, time, params, use_gate=False)
    out_ng = jax.block_until_ready(
        bond_ffn(bond_in, node_in, time, params, use_gate=False))
    assert bool(jnp.allclose(out_ng, ref_ng, **tol)), "ungated mismatch"

    print("KERNEL_OK")
</pallas_src>

<mosaic_0001>
module attributes {stable_mosaic.version = 11 : i64} {
  func.func @_bond_ffn_gated_kernel(%arg0: i32, %arg1: memref<38x128xf32, #tpu.memory_space<vmem>>, %arg2: memref<38x128xf32, #tpu.memory_space<vmem>>, %arg3: memref<38x8xf32, #tpu.memory_space<vmem>>, %arg4: memref<128x512xf32, #tpu.memory_space<vmem>>, %arg5: memref<128x512xf32, #tpu.memory_space<vmem>>, %arg6: memref<8x256xf32, #tpu.memory_space<vmem>>, %arg7: memref<256x256xf32, #tpu.memory_space<vmem>>, %arg8: memref<1x256xf32, #tpu.memory_space<vmem>>, %arg9: memref<256x128xf32, #tpu.memory_space<vmem>>, %arg10: memref<1x128xf32, #tpu.memory_space<vmem>>, %arg11: memref<1x256xf32, #tpu.memory_space<vmem>>, %arg12: memref<256x128xf32, #tpu.memory_space<vmem>>, %arg13: memref<1x128xf32, #tpu.memory_space<vmem>>, %arg14: memref<38x128xf32, #tpu.memory_space<vmem>>) attributes {dimension_semantics = [#tpu.dimension_semantics<parallel>], iteration_bounds = array<i64: 1>, scalar_prefetch = 0 : i64, scratch_operands = 0 : i64, tpu.core_type = #tpu.core_type<tc>, window_params = [{transform_indices = @transform_0, window_bounds = array<i64: 38, 128>}, {transform_indices = @transform_1, window_bounds = array<i64: 38, 128>}, {transform_indices = @transform_2, window_bounds = array<i64: 38, 8>}, {pipeline_mode = #tpu.pipeline_mode<synchronous>, transform_indices = @transform_3, window_bounds = array<i64: 128, 512>}, {pipeline_mode = #tpu.pipeline_mode<synchronous>, transform_indices = @transform_4, window_bounds = array<i64: 128, 512>}, {pipeline_mode = #tpu.pipeline_mode<synchronous>, transform_indices = @transform_5, window_bounds = array<i64: 8, 256>}, {pipeline_mode = #tpu.pipeline_mode<synchronous>, transform_indices = @transform_6, window_bounds = array<i64: 256, 256>}, {pipeline_mode = #tpu.pipeline_mode<synchronous>, transform_indices = @transform_7, window_bounds = array<i64: 1, 256>}, {pipeline_mode = #tpu.pipeline_mode<synchronous>, transform_indices = @transform_8, window_bounds = array<i64: 256, 128>}, {pipeline_mode = #tpu.pipeline_mode<synchronous>, transform_indices = @transform_9, window_bounds = array<i64: 1, 128>}, {pipeline_mode = #tpu.pipeline_mode<synchronous>, transform_indices = @transform_10, window_bounds = array<i64: 1, 256>}, {pipeline_mode = #tpu.pipeline_mode<synchronous>, transform_indices = @transform_11, window_bounds = array<i64: 256, 128>}, {pipeline_mode = #tpu.pipeline_mode<synchronous>, transform_indices = @transform_12, window_bounds = array<i64: 1, 128>}, {transform_indices = @transform_13, window_bounds = array<i64: 38, 128>}]} {
    %c0 = arith.constant 0 : index
    %c0_0 = arith.constant 0 : index
    %0 = vector.load %arg1[%c0, %c0_0] : memref<38x128xf32, #tpu.memory_space<vmem>>, vector<38x128xf32>
    %c0_1 = arith.constant 0 : index
    %c0_2 = arith.constant 0 : index
    %1 = vector.load %arg2[%c0_1, %c0_2] : memref<38x128xf32, #tpu.memory_space<vmem>>, vector<38x128xf32>
    %c0_3 = arith.constant 0 : index
    %c0_4 = arith.constant 0 : index
    %2 = vector.load %arg4[%c0_3, %c0_4] : memref<128x512xf32, #tpu.memory_space<vmem>>, vector<128x512xf32>
    %cst = arith.constant dense<0.000000e+00> : vector<38x512xf32>
    %3 = tpu.matmul %0, %2, %cst {dimension_numbers = #tpu.dot_dimension_numbers<[1], [0], [0], [1], [0, 0, 1, 1], [], []>} : vector<38x128xf32>, vector<128x512xf32>, vector<38x512xf32> -> vector<38x512xf32>
    %c0_5 = arith.constant 0 : index
    %c0_6 = arith.constant 0 : index
    %4 = vector.load %arg5[%c0_5, %c0_6] : memref<128x512xf32, #tpu.memory_space<vmem>>, vector<128x512xf32>
    %cst_7 = arith.constant dense<0.000000e+00> : vector<38x512xf32>
    %5 = tpu.matmul %1, %4, %cst_7 {dimension_numbers = #tpu.dot_dimension_numbers<[1], [0], [0], [1], [0, 0, 1, 1], [], []>} : vector<38x128xf32>, vector<128x512xf32>, vector<38x512xf32> -> vector<38x512xf32>
    %6 = vector.extract_strided_slice %3 {offsets = [0, 0], sizes = [38, 256], strides = [1, 1]} : vector<38x512xf32> to vector<38x256xf32>
    %7 = vector.extract_strided_slice %5 {offsets = [0, 0], sizes = [38, 256], strides = [1, 1]} : vector<38x512xf32> to vector<38x256xf32>
    %8 = arith.mulf %6, %7 : vector<38x256xf32>
    %c0_8 = arith.constant 0 : index
    %c0_9 = arith.constant 0 : index
    %9 = vector.load %arg7[%c0_8, %c0_9] : memref<256x256xf32, #tpu.memory_space<vmem>>, vector<256x256xf32>
    %cst_10 = arith.constant dense<0.000000e+00> : vector<38x256xf32>
    %10 = tpu.matmul %8, %9, %cst_10 {dimension_numbers = #tpu.dot_dimension_numbers<[1], [0], [0], [1], [0, 0, 1, 1], [], []>} : vector<38x256xf32>, vector<256x256xf32>, vector<38x256xf32> -> vector<38x256xf32>
    %c0_11 = arith.constant 0 : index
    %c0_12 = arith.constant 0 : index
    %11 = vector.load %arg8[%c0_11, %c0_12] : memref<1x256xf32, #tpu.memory_space<vmem>>, vector<1x256xf32>
    %12 = vector.broadcast %11 : vector<1x256xf32> to vector<38x256xf32>
    %13 = arith.addf %10, %12 : vector<38x256xf32>
    %cst_13 = arith.constant 0.000000e+00 : f32
    %14 = vector.broadcast %cst_13 : f32 to vector<38x256xf32>
    %15 = arith.maximumf %13, %14 : vector<38x256xf32>
    %c0_14 = arith.constant 0 : index
    %c0_15 = arith.constant 0 : index
    %16 = vector.load %arg9[%c0_14, %c0_15] : memref<256x128xf32, #tpu.memory_space<vmem>>, vector<256x128xf32>
    %cst_16 = arith.constant dense<0.000000e+00> : vector<38x128xf32>
    %17 = tpu.matmul %15, %16, %cst_16 {dimension_numbers = #tpu.dot_dimension_numbers<[1], [0], [0], [1], [0, 0, 1, 1], [], []>} : vector<38x256xf32>, vector<256x128xf32>, vector<38x128xf32> -> vector<38x128xf32>
    %c0_17 = arith.constant 0 : index
    %c0_18 = arith.constant 0 : index
    %18 = vector.load %arg10[%c0_17, %c0_18] : memref<1x128xf32, #tpu.memory_space<vmem>>, vector<1x128xf32>
    %19 = vector.broadcast %18 : vector<1x128xf32> to vector<38x128xf32>
    %20 = arith.addf %17, %19 : vector<38x128xf32>
    %21 = vector.extract_strided_slice %3 {offsets = [0, 256], sizes = [38, 256], strides = [1, 1]} : vector<38x512xf32> to vector<38x256xf32>
    %22 = vector.extract_strided_slice %5 {offsets = [0, 256], sizes = [38, 256], strides = [1, 1]} : vector<38x512xf32> to vector<38x256xf32>
    %23 = arith.addf %21, %22 : vector<38x256xf32>
    %c0_19 = arith.constant 0 : index
    %c0_20 = arith.constant 0 : index
    %24 = vector.load %arg3[%c0_19, %c0_20] : memref<38x8xf32, #tpu.memory_space<vmem>>, vector<38x8xf32>
    %c0_21 = arith.constant 0 : index
    %c0_22 = arith.constant 0 : index
    %25 = vector.load %arg6[%c0_21, %c0_22] : memref<8x256xf32, #tpu.memory_space<vmem>>, vector<8x256xf32>
    %cst_23 = arith.constant dense<0.000000e+00> : vector<38x256xf32>
    %26 = tpu.matmul %24, %25, %cst_23 {dimension_numbers = #tpu.dot_dimension_numbers<[1], [0], [0], [1], [0, 0, 1, 1], [], []>} : vector<38x8xf32>, vector<8x256xf32>, vector<38x256xf32> -> vector<38x256xf32>
    %27 = arith.addf %23, %26 : vector<38x256xf32>
    %c0_24 = arith.constant 0 : index
    %c0_25 = arith.constant 0 : index
    %28 = vector.load %arg11[%c0_24, %c0_25] : memref<1x256xf32, #tpu.memory_space<vmem>>, vector<1x256xf32>
    %29 = vector.broadcast %28 : vector<1x256xf32> to vector<38x256xf32>
    %30 = arith.addf %27, %29 : vector<38x256xf32>
    %cst_26 = arith.constant 0.000000e+00 : f32
    %31 = vector.broadcast %cst_26 : f32 to vector<38x256xf32>
    %32 = arith.maximumf %30, %31 : vector<38x256xf32>
    %c0_27 = arith.constant 0 : index
    %c0_28 = arith.constant 0 : index
    %33 = vector.load %arg12[%c0_27, %c0_28] : memref<256x128xf32, #tpu.memory_space<vmem>>, vector<256x128xf32>
    %cst_29 = arith.constant dense<0.000000e+00> : vector<38x128xf32>
    %34 = tpu.matmul %32, %33, %cst_29 {dimension_numbers = #tpu.dot_dimension_numbers<[1], [0], [0], [1], [0, 0, 1, 1], [], []>} : vector<38x256xf32>, vector<256x128xf32>, vector<38x128xf32> -> vector<38x128xf32>
    %c0_30 = arith.constant 0 : index
    %c0_31 = arith.constant 0 : index
    %35 = vector.load %arg13[%c0_30, %c0_31] : memref<1x128xf32, #tpu.memory_space<vmem>>, vector<1x128xf32>
    %36 = vector.broadcast %35 : vector<1x128xf32> to vector<38x128xf32>
    %37 = arith.addf %34, %36 : vector<38x128xf32>
    %38 = arith.negf %37 : vector<38x128xf32>
    %39 = math.exp %38 : vector<38x128xf32>
    %cst_32 = arith.constant 1.000000e+00 : f32
    %40 = vector.broadcast %cst_32 : f32 to vector<38x128xf32>
    %41 = arith.addf %40, %39 : vector<38x128xf32>
    %42 = arith.divf %40, %41 : vector<38x128xf32>
    %43 = arith.mulf %20, %42 : vector<38x128xf32>
    %c0_33 = arith.constant 0 : index
    %c0_34 = arith.constant 0 : index
    %44 = vector.load %arg14[%c0_33, %c0_34] : memref<38x128xf32, #tpu.memory_space<vmem>>, vector<38x128xf32>
    tpu.vector_store %arg14[%c0_33, %c0_34], %43 {strides = array<i32>} : memref<38x128xf32, #tpu.memory_space<vmem>>, vector<38x128xf32>,
    return
  }
  func.func @transform_0(%arg0: i32) -> (i32, i32) {
    %c0_i32 = arith.constant 0 : i32
    %c0_i32_0 = arith.constant 0 : i32
    return %arg0, %c0_i32 : i32, i32
  }
  func.func @transform_1(%arg0: i32) -> (i32, i32) {
    %c0_i32 = arith.constant 0 : i32
    %c0_i32_0 = arith.constant 0 : i32
    return %arg0, %c0_i32 : i32, i32
  }
  func.func @transform_2(%arg0: i32) -> (i32, i32) {
    %c0_i32 = arith.constant 0 : i32
    %c0_i32_0 = arith.constant 0 : i32
    return %arg0, %c0_i32 : i32, i32
  }
  func.func @transform_3(%arg0: i32) -> (i32, i32) {
    %c0_i32 = arith.constant 0 : i32
    %c0_i32_0 = arith.constant 0 : i32
    %c0_i32_1 = arith.constant 0 : i32
    return %c0_i32, %c0_i32_0 : i32, i32
  }
  func.func @transform_4(%arg0: i32) -> (i32, i32) {
    %c0_i32 = arith.constant 0 : i32
    %c0_i32_0 = arith.constant 0 : i32
    %c0_i32_1 = arith.constant 0 : i32
    return %c0_i32, %c0_i32_0 : i32, i32
  }
  func.func @transform_5(%arg0: i32) -> (i32, i32) {
    %c0_i32 = arith.constant 0 : i32
    %c0_i32_0 = arith.constant 0 : i32
    %c0_i32_1 = arith.constant 0 : i32
    return %c0_i32, %c0_i32_0 : i32, i32
  }
  func.func @transform_6(%arg0: i32) -> (i32, i32) {
    %c0_i32 = arith.constant 0 : i32
    %c0_i32_0 = arith.constant 0 : i32
    %c0_i32_1 = arith.constant 0 : i32
    return %c0_i32, %c0_i32_0 : i32, i32
  }
  func.func @transform_7(%arg0: i32) -> (i32, i32) {
    %c0_i32 = arith.constant 0 : i32
    %c0_i32_0 = arith.constant 0 : i32
    %c0_i32_1 = arith.constant 0 : i32
    return %c0_i32, %c0_i32_0 : i32, i32
  }
  func.func @transform_8(%arg0: i32) -> (i32, i32) {
    %c0_i32 = arith.constant 0 : i32
    %c0_i32_0 = arith.constant 0 : i32
    %c0_i32_1 = arith.constant 0 : i32
    return %c0_i32, %c0_i32_0 : i32, i32
  }
  func.func @transform_9(%arg0: i32) -> (i32, i32) {
    %c0_i32 = arith.constant 0 : i32
    %c0_i32_0 = arith.constant 0 : i32
    %c0_i32_1 = arith.constant 0 : i32
    return %c0_i32, %c0_i32_0 : i32, i32
  }
  func.func @transform_10(%arg0: i32) -> (i32, i32) {
    %c0_i32 = arith.constant 0 : i32
    %c0_i32_0 = arith.constant 0 : i32
    %c0_i32_1 = arith.constant 0 : i32
    return %c0_i32, %c0_i32_0 : i32, i32
  }
  func.func @transform_11(%arg0: i32) -> (i32, i32) {
    %c0_i32 = arith.constant 0 : i32
    %c0_i32_0 = arith.constant 0 : i32
    %c0_i32_1 = arith.constant 0 : i32
    return %c0_i32, %c0_i32_0 : i32, i32
  }
  func.func @transform_12(%arg0: i32) -> (i32, i32) {
    %c0_i32 = arith.constant 0 : i32
    %c0_i32_0 = arith.constant 0 : i32
    %c0_i32_1 = arith.constant 0 : i32
    return %c0_i32, %c0_i32_0 : i32, i32
  }
  func.func @transform_13(%arg0: i32) -> (i32, i32) {
    %c0_i32 = arith.constant 0 : i32
    %c0_i32_0 = arith.constant 0 : i32
    return %arg0, %c0_i32 : i32, i32
  }
}

</mosaic_0001>

<llo_original>
// kernel: tpu_custom_call.1
$region0: #{tpu_custom_call.1}
  #allocation0 [shape = 'u32[]', space=smem, size = 0x4, offset = 0x4, fixed_abs, tag = 'smem constant byte address 0x4 - core index']
  #allocation1 [shape = 'u32[144,128]{1,0:T(1,128)}', space=vmem, size = 0x12000, scoped, tag = 'internal scratch']
  %s0 = inlined_call_operand.vmem [shape: f32[38,128], index: 0, kind: input, shape index: {}]
  %s1 = inlined_call_operand.hbm [shape: f32[38,128], index: 1, kind: input, shape index: {}]
  %s2 = inlined_call_operand.vmem [shape: f32[38,8], index: 2, kind: input, shape index: {}]
  %s3 = inlined_call_operand.hbm [shape: f32[128,512], index: 3, kind: input, shape index: {}]
  %s4 = inlined_call_operand.hbm [shape: f32[128,512], index: 4, kind: input, shape index: {}]
  %s5 = inlined_call_operand.vmem [shape: f32[8,256], index: 5, kind: input, shape index: {}]
  %s6 = inlined_call_operand.hbm [shape: f32[256,256], index: 6, kind: input, shape index: {}]
  %s7 = inlined_call_operand.vmem [shape: f32[1,256], index: 7, kind: input, shape index: {}]
  %s8 = inlined_call_operand.hbm [shape: f32[256,128], index: 8, kind: input, shape index: {}]
  %s9 = inlined_call_operand.vmem [shape: f32[1,128], index: 9, kind: input, shape index: {}]
  %s10 = inlined_call_operand.vmem [shape: f32[1,256], index: 10, kind: input, shape index: {}]
  %s11 = inlined_call_operand.hbm [shape: f32[256,128], index: 11, kind: input, shape index: {}]
  %s12 = inlined_call_operand.vmem [shape: f32[1,128], index: 12, kind: input, shape index: {}]
  %s13 = inlined_call_operand.hbm [shape: f32[38,128], index: 13, kind: output, shape index: {}]
  %s14 = sld [smem:[#allocation0]]
  $region86: #{tpu_custom_call.1} parent=0
    _
  %s16 = ssub.s32 1, %s14
  %s17 = scalar_select 0, %s16, %s14
  $region1: #{tpu_custom_call.1} parent=0
    #allocation2 [shape = 'u8[20480]{0}', space=vmem, size = 0x5000, scoped, tag = 'input window, operand 1, single buffered']
    #allocation3 [shape = 's32[1]{0}', space=sflag, size = 0x4, scoped, tag = 'scoped memory for tpu_custom_call.1']
    #allocation4 [shape = 's32[1]{0}', space=sflag, size = 0x4, scoped, tag = 'scoped memory for tpu_custom_call.1']
    #allocation5 [shape = 'u8[262144]{0}', space=vmem, size = 0x40000, scoped, tag = 'input window, operand 3, single buffered']
    #allocation6 [shape = 's32[1]{0}', space=sflag, size = 0x4, scoped, tag = 'scoped memory for tpu_custom_call.1']
    #allocation7 [shape = 'u8[262144]{0}', space=vmem, size = 0x40000, scoped, tag = 'input window, operand 4, single buffered']
    #allocation8 [shape = 'u8[262144]{0}', space=vmem, size = 0x40000, scoped, tag = 'input window, operand 6, single buffered']
    #allocation9 [shape = 's32[1]{0}', space=sflag, size = 0x4, scoped, tag = 'scoped memory for tpu_custom_call.1']
    #allocation10 [shape = 'u8[131072]{0}', space=vmem, size = 0x20000, scoped, tag = 'input window, operand 8, single buffered']
    #allocation11 [shape = 'u8[131072]{0}', space=vmem, size = 0x20000, scoped, tag = 'input window, operand 11, single buffered']
    #allocation12 [shape = 's32[1]{0}', space=sflag, size = 0x4, scoped, tag = 'scoped memory for tpu_custom_call.1']
    #allocation13 [shape = 'u8[20480]{0}', space=vmem, size = 0x5000, scoped, tag = 'output window, operand 0, single buffered']
    %18 = vsyncpa [#allocation3], 0
    %19 = vsyncpa [#allocation6], 0
    %20 = vsyncpa [#allocation9], 0
    %21 = vsyncpa [#allocation12], 0
    %22 = vsyncpa [#allocation4], 0
    // Predicated region
    $region2: #{tpu_custom_call.1} parent=1 // pred_check
      _
    $region3: #{tpu_custom_call.1} parent=1 // pred_check_branch
      %24 = sbr.rel (0) target = $region5
    $region4: #{tpu_custom_call.1} parent=1 // pred_region
      _
    $region5: #{tpu_custom_call.1} parent=1 // pred_fallthru
      _
    // Predicated region
    $region6: #{tpu_custom_call.1} parent=1 // pred_check
      _
    $region7: #{tpu_custom_call.1} parent=1 // pred_check_branch
      %26 = sbr.rel (0) target = $region9
    $region8: #{tpu_custom_call.1} parent=1 // pred_region
      %s28 = ssub.s32 640, 640
      %29 = vsyncadd [#allocation3], %s28
      %s30 = sshll.u32 [#allocation2], 4
      %s31 = int_to_ptr.vmem [resolvable:$true] %s30
      %36 = dma.hbm_to_vmem [thread:$0]  %s1, 640, %s31, [#allocation3], 128, 128, 8
    $region9: #{tpu_custom_call.1} parent=1 // pred_fallthru
      _
    // Predicated region
    $region10: #{tpu_custom_call.1} parent=1 // pred_check
      _
    $region11: #{tpu_custom_call.1} parent=1 // pred_check_branch
      %38 = sbr.rel (0) target = $region13
    $region12: #{tpu_custom_call.1} parent=1 // pred_region
      _
    $region13: #{tpu_custom_call.1} parent=1 // pred_fallthru
      _
    // Predicated region
    $region14: #{tpu_custom_call.1} parent=1 // pred_check
      _
    $region15: #{tpu_custom_call.1} parent=1 // pred_check_branch
      %40 = sbr.rel (0) target = $region17
    $region16: #{tpu_custom_call.1} parent=1 // pred_region
      %s42 = ssub.s32 8192, 8192
      %43 = vsyncadd [#allocation6], %s42
      %s44 = sshll.u32 [#allocation5], 4
      %s45 = int_to_ptr.vmem [resolvable:$true] %s44
      %50 = dma.hbm_to_vmem [thread:$0]  %s3, 8192, %s45, [#allocation6], 512, 512, 32
    $region17: #{tpu_custom_call.1} parent=1 // pred_fallthru
      _
    // Predicated region
    $region18: #{tpu_custom_call.1} parent=1 // pred_check
      _
    $region19: #{tpu_custom_call.1} parent=1 // pred_check_branch
      %52 = sbr.rel (0) target = $region21
    $region20: #{tpu_custom_call.1} parent=1 // pred_region
      %s54 = ssub.s32 8192, 8192
      %55 = vsyncadd [#allocation6], %s54
      %s56 = sshll.u32 [#allocation7], 4
      %s57 = int_to_ptr.vmem [resolvable:$true] %s56
      %62 = dma.hbm_to_vmem [thread:$0]  %s4, 8192, %s57, [#allocation6], 512, 512, 32
    $region21: #{tpu_custom_call.1} parent=1 // pred_fallthru
      _
    // Predicated region
    $region22: #{tpu_custom_call.1} parent=1 // pred_check
      _
    $region23: #{tpu_custom_call.1} parent=1 // pred_check_branch
      %64 = sbr.rel (0) target = $region25
    $region24: #{tpu_custom_call.1} parent=1 // pred_region
      _
    $region25: #{tpu_custom_call.1} parent=1 // pred_fallthru
      _
    // Predicated region
    $region26: #{tpu_custom_call.1} parent=1 // pred_check
      _
    $region27: #{tpu_custom_call.1} parent=1 // pred_check_branch
      %66 = sbr.rel (0) target = $region29
    $region28: #{tpu_custom_call.1} parent=1 // pred_region
      %s68 = ssub.s32 8192, 8192
      %69 = vsyncadd [#allocation9], %s68
      %s70 = sshll.u32 [#allocation8], 4
      %s71 = int_to_ptr.vmem [resolvable:$true] %s70
      %76 = dma.hbm_to_vmem [thread:$0]  %s6, 8192, %s71, [#allocation9], 256, 256, 16
    $region29: #{tpu_custom_call.1} parent=1 // pred_fallthru
      _
    // Predicated region
    $region30: #{tpu_custom_call.1} parent=1 // pred_check
      _
    $region31: #{tpu_custom_call.1} parent=1 // pred_check_branch
      %78 = sbr.rel (0) target = $region33
    $region32: #{tpu_custom_call.1} parent=1 // pred_region
      _
    $region33: #{tpu_custom_call.1} parent=1 // pred_fallthru
      _
    // Predicated region
    $region34: #{tpu_custom_call.1} parent=1 // pred_check
      _
    $region35: #{tpu_custom_call.1} parent=1 // pred_check_branch
      %80 = sbr.rel (0) target = $region37
    $region36: #{tpu_custom_call.1} parent=1 // pred_region
      %s82 = ssub.s32 4096, 4096
      %83 = vsyncadd [#allocation9], %s82
      %s84 = sshll.u32 [#allocation10], 4
      %s85 = int_to_ptr.vmem [resolvable:$true] %s84
      %90 = dma.hbm_to_vmem [thread:$0]  %s8, 4096, %s85, [#allocation9], 128, 128, 8
    $region37: #{tpu_custom_call.1} parent=1 // pred_fallthru
      _
    // Predicated region
    $region38: #{tpu_custom_call.1} parent=1 // pred_check
      _
    $region39: #{tpu_custom_call.1} parent=1 // pred_check_branch
      %92 = sbr.rel (0) target = $region41
    $region40: #{tpu_custom_call.1} parent=1 // pred_region
      _
    $region41: #{tpu_custom_call.1} parent=1 // pred_fallthru
      _
    // Predicated region
    $region42: #{tpu_custom_call.1} parent=1 // pred_check
      _
    $region43: #{tpu_custom_call.1} parent=1 // pred_check_branch
      %94 = sbr.rel (0) target = $region45
    $region44: #{tpu_custom_call.1} parent=1 // pred_region
      _
    $region45: #{tpu_custom_call.1} parent=1 // pred_fallthru
      _
    // Predicated region
    $region46: #{tpu_custom_call.1} parent=1 // pred_check
      _
    $region47: #{tpu_custom_call.1} parent=1 // pred_check_branch
      %96 = sbr.rel (0) target = $region49
    $region48: #{tpu_custom_call.1} parent=1 // pred_region
      %s98 = ssub.s32 4096, 4096
      %99 = vsyncadd [#allocation12], %s98
      %s100 = sshll.u32 [#allocation11], 4
      %s101 = int_to_ptr.vmem [resolvable:$true] %s100
      %106 = dma.hbm_to_vmem [thread:$0]  %s11, 4096, %s101, [#allocation12], 128, 128, 8
    $region49: #{tpu_custom_call.1} parent=1 // pred_fallthru
      _
    // Predicated region
    $region50: #{tpu_custom_call.1} parent=1 // pred_check
      _
    $region51: #{tpu_custom_call.1} parent=1 // pred_check_branch
      %108 = sbr.rel (0) target = $region53
    $region52: #{tpu_custom_call.1} parent=1 // pred_region
      _
    $region53: #{tpu_custom_call.1} parent=1 // pred_fallthru
      _
    // Predicated region
    $region54: #{tpu_custom_call.1} parent=1 // pred_check
      _
    $region55: #{tpu_custom_call.1} parent=1 // pred_check_branch
      %110 = sbr.rel (0) target = $region57
    $region56: #{tpu_custom_call.1} parent=1 // pred_region
      %111 = dma.done [#allocation3], 640
    $region57: #{tpu_custom_call.1} parent=1 // pred_fallthru
      _
    // Predicated region
    $region58: #{tpu_custom_call.1} parent=1 // pred_check
      _
    $region59: #{tpu_custom_call.1} parent=1 // pred_check_branch
      %113 = sbr.rel (0) target = $region61
    $region60: #{tpu_custom_call.1} parent=1 // pred_region
      %114 = dma.done [#allocation6], 8192
    $region61: #{tpu_custom_call.1} parent=1 // pred_fallthru
      _
    // Predicated region
    $region62: #{tpu_custom_call.1} parent=1 // pred_check
      _
    $region63: #{tpu_custom_call.1} parent=1 // pred_check_branch
      %116 = sbr.rel (0) target = $region65
    $region64: #{tpu_custom_call.1} parent=1 // pred_region
      %117 = dma.done [#allocation6], 8192
    $region65: #{tpu_custom_call.1} parent=1 // pred_fallthru
      _
    // Predicated region
    $region66: #{tpu_custom_call.1} parent=1 // pred_check
      _
    $region67: #{tpu_custom_call.1} parent=1 // pred_check_branch
      %119 = sbr.rel (0) target = $region69
    $region68: #{tpu_custom_call.1} parent=1 // pred_region
      %120 = dma.done [#allocation9], 8192
    $region69: #{tpu_custom_call.1} parent=1 // pred_fallthru
      _
    // Predicated region
    $region70: #{tpu_custom_call.1} parent=1 // pred_check
      _
    $region71: #{tpu_custom_call.1} parent=1 // pred_check_branch
      %122 = sbr.rel (0) target = $region73
    $region72: #{tpu_custom_call.1} parent=1 // pred_region
      %123 = dma.done [#allocation9], 4096
    $region73: #{tpu_custom_call.1} parent=1 // pred_fallthru
      _
    // Predicated region
    $region74: #{tpu_custom_call.1} parent=1 // pred_check
      _
    $region75: #{tpu_custom_call.1} parent=1 // pred_check_branch
      %125 = sbr.rel (0) target = $region77
    $region76: #{tpu_custom_call.1} parent=1 // pred_region
      %126 = dma.done [#allocation12], 4096
    $region77: #{tpu_custom_call.1} parent=1 // pred_fallthru
      _
    %v127 = vld [vmem:[%s0] sm:$0xff]
    %v128 = vld [vmem:[%s0 + $0x8] sm:$0xff]
    %v129 = vld [vmem:[%s0 + $0x10] sm:$0xff]
    %v130 = vld [vmem:[%s0 + $0x18] sm:$0xff]
    %v131 = vld [vmem:[%s0 + $0x20] sm:$0x3f]
    %v132 = vld [vmem:[#allocation2] sm:$0xff]
    %v133 = vld [vmem:[#allocation2 + $0x8] sm:$0xff]
    %v134 = vld [vmem:[#allocation2 + $0x10] sm:$0xff]
    %v135 = vld [vmem:[#allocation2 + $0x18] sm:$0xff]
    %v136 = vld [vmem:[#allocation2 + $0x20] sm:$0x3f]
    %v137 = vld [vmem:[#allocation5] sm:$0xff]
    %v138 = vld [vmem:[#allocation5 + $0x8] sm:$0xff]
    %v139 = vld [vmem:[#allocation5 + $0x10] sm:$0xff]
    %v140 = vld [vmem:[#allocation5 + $0x18] sm:$0xff]
    %v141 = vld [vmem:[#allocation5 + $0x20] sm:$0xff]
    %v142 = vld [vmem:[#allocation5 + $0x28] sm:$0xff]
    %v143 = vld [vmem:[#allocation5 + $0x30] sm:$0xff]
    %v144 = vld [vmem:[#allocation5 + $0x38] sm:$0xff]
    %v145 = vld [vmem:[#allocation5 + $0x40] sm:$0xff]
    %v146 = vld [vmem:[#allocation5 + $0x48] sm:$0xff]
    %v147 = vld [vmem:[#allocation5 + $0x50] sm:$0xff]
    %v148 = vld [vmem:[#allocation5 + $0x58] sm:$0xff]
    %v149 = vld [vmem:[#allocation5 + $0x60] sm:$0xff]
    %v150 = vld [vmem:[#allocation5 + $0x68] sm:$0xff]
    %v151 = vld [vmem:[#allocation5 + $0x70] sm:$0xff]
    %v152 = vld [vmem:[#allocation5 + $0x78] sm:$0xff]
    %v153 = vld [vmem:[#allocation5 + $0x80] sm:$0xff]
    %v154 = vld [vmem:[#allocation5 + $0x88] sm:$0xff]
    %v155 = vld [vmem:[#allocation5 + $0x90] sm:$0xff]
    %v156 = vld [vmem:[#allocation5 + $0x98] sm:$0xff]
    %v157 = vld [vmem:[#allocation5 + $0xa0] sm:$0xff]
    %v158 = vld [vmem:[#allocation5 + $0xa8] sm:$0xff]
    %v159 = vld [vmem:[#allocation5 + $0xb0] sm:$0xff]
    %v160 = vld [vmem:[#allocation5 + $0xb8] sm:$0xff]
    %v161 = vld [vmem:[#allocation5 + $0xc0] sm:$0xff]
    %v162 = vld [vmem:[#allocation5 + $0xc8] sm:$0xff]
    %v163 = vld [vmem:[#allocation5 + $0xd0] sm:$0xff]
    %v164 = vld [vmem:[#allocation5 + $0xd8] sm:$0xff]
    %v165 = vld [vmem:[#allocation5 + $0xe0] sm:$0xff]
    %v166 = vld [vmem:[#allocation5 + $0xe8] sm:$0xff]
    %v167 = vld [vmem:[#allocation5 + $0xf0] sm:$0xff]
    %v168 = vld [vmem:[#allocation5 + $0xf8] sm:$0xff]
    %v169 = vld [vmem:[#allocation5 + $0x100] sm:$0xff]
    %v170 = vld [vmem:[#allocation5 + $0x108] sm:$0xff]
    %v171 = vld [vmem:[#allocation5 + $0x110] sm:$0xff]
    %v172 = vld [vmem:[#allocation5 + $0x118] sm:$0xff]
    %v173 = vld [vmem:[#allocation5 + $0x120] sm:$0xff]
    %v174 = vld [vmem:[#allocation5 + $0x128] sm:$0xff]
    %v175 = vld [vmem:[#allocation5 + $0x130] sm:$0xff]
    %v176 = vld [vmem:[#allocation5 + $0x138] sm:$0xff]
    %v177 = vld [vmem:[#allocation5 + $0x140] sm:$0xff]
    %v178 = vld [vmem:[#allocation5 + $0x148] sm:$0xff]
    %v179 = vld [vmem:[#allocation5 + $0x150] sm:$0xff]
    %v180 = vld [vmem:[#allocation5 + $0x158] sm:$0xff]
    %v181 = vld [vmem:[#allocation5 + $0x160] sm:$0xff]
    %v182 = vld [vmem:[#allocation5 + $0x168] sm:$0xff]
    %v183 = vld [vmem:[#allocation5 + $0x170] sm:$0xff]
    %v184 = vld [vmem:[#allocation5 + $0x178] sm:$0xff]
    %v185 = vld [vmem:[#allocation5 + $0x180] sm:$0xff]
    %v186 = vld [vmem:[#allocation5 + $0x188] sm:$0xff]
    %v187 = vld [vmem:[#allocation5 + $0x190] sm:$0xff]
    %v188 = vld [vmem:[#allocation5 + $0x198] sm:$0xff]
    %v189 = vld [vmem:[#allocation5 + $0x1a0] sm:$0xff]
    %v190 = vld [vmem:[#allocation5 + $0x1a8] sm:$0xff]
    %v191 = vld [vmem:[#allocation5 + $0x1b0] sm:$0xff]
    %v192 = vld [vmem:[#allocation5 + $0x1b8] sm:$0xff]
    %v193 = vld [vmem:[#allocation5 + $0x1c0] sm:$0xff]
    %v194 = vld [vmem:[#allocation5 + $0x1c8] sm:$0xff]
    %v195 = vld [vmem:[#allocation5 + $0x1d0] sm:$0xff]
    %v196 = vld [vmem:[#allocation5 + $0x1d8] sm:$0xff]
    %v197 = vld [vmem:[#allocation5 + $0x1e0] sm:$0xff]
    %v198 = vld [vmem:[#allocation5 + $0x1e8] sm:$0xff]
    %v199 = vld [vmem:[#allocation5 + $0x1f0] sm:$0xff]
    %v200 = vld [vmem:[#allocation5 + $0x1f8] sm:$0xff]
    %201 = vmatprep.subr.mxu0 %v138
    %202 = vmatpush1.msra.mxu0 %v137
    %203 = vmatprep.subr.mxu0 %v142
    %204 = vmatpush1.msra.mxu0 %v141
    %205 = vmatprep.subr.mxu0 %v146
    %206 = vmatpush1.msra.mxu0 %v145
    %207 = vmatprep.subr.mxu0 %v150
    %208 = vmatpush1.msra.mxu0 %v149
    %209 = vmatprep.subr.mxu0 %v154
    %210 = vmatpush1.msra.mxu0 %v153
    %211 = vmatprep.subr.mxu0 %v158
    %212 = vmatpush1.msra.mxu0 %v157
    %213 = vmatprep.subr.mxu0 %v162
    %214 = vmatpush1.msra.mxu0 %v161
    %215 = vmatprep.subr.mxu0 %v166
    %216 = vmatpush1.msra.mxu0 %v165
    %217 = vmatprep.subr.mxu0 %v170
    %218 = vmatpush1.msra.mxu0 %v169
    %219 = vmatprep.subr.mxu0 %v174
    %220 = vmatpush1.msra.mxu0 %v173
    %221 = vmatprep.subr.mxu0 %v178
    %222 = vmatpush1.msra.mxu0 %v177
    %223 = vmatprep.subr.mxu0 %v182
    %224 = vmatpush1.msra.mxu0 %v181
    %225 = vmatprep.subr.mxu0 %v186
    %226 = vmatpush1.msra.mxu0 %v185
    %227 = vmatprep.subr.mxu0 %v190
    %228 = vmatpush1.msra.mxu0 %v189
    %229 = vmatprep.subr.mxu0 %v194
    %230 = vmatpush1.msra.mxu0 %v193
    %231 = vmatprep.subr.mxu0 %v198
    %232 = vmatpush1.msra.mxu0 %v197
    %233 = vmatprep.subr.mxu0 0.0
    %234 = vmatpush1.msra.mxu0 0.0
    %235 = vmatprep.subr.mxu0 0.0
    %236 = vmatpush1.msra.mxu0 0.0
    %237 = vmatprep.subr.mxu0 0.0
    %238 = vmatpush1.msra.mxu0 0.0
    %239 = vmatprep.subr.mxu0 0.0
    %240 = vmatpush1.msra.mxu0 0.0
    %241 = vmatprep.subr.mxu0 0.0
    %242 = vmatpush1.msra.mxu0 0.0
    %243 = vmatprep.subr.mxu0 0.0
    %244 = vmatpush1.msra.mxu0 0.0
    %245 = vmatprep.subr.mxu0 0.0
    %246 = vmatpush1.msra.mxu0 0.0
    %247 = vmatprep.subr.mxu0 0.0
    %248 = vmatpush1.msra.mxu0 0.0
    %249 = vmatprep.subr.mxu0 0.0
    %250 = vmatpush1.msra.mxu0 0.0
    %251 = vmatprep.subr.mxu0 0.0
    %252 = vmatpush1.msra.mxu0 0.0
    %253 = vmatprep.subr.mxu0 0.0
    %254 = vmatpush1.msra.mxu0 0.0
    %255 = vmatprep.subr.mxu0 0.0
    %256 = vmatpush1.msra.mxu0 0.0
    %257 = vmatprep.subr.mxu0 0.0
    %258 = vmatpush1.msra.mxu0 0.0
    %259 = vmatprep.subr.mxu0 0.0
    %260 = vmatpush1.msra.mxu0 0.0
    %261 = vmatprep.subr.mxu0 0.0
    %262 = vmatpush1.msra.mxu0 0.0
    %263 = vmatprep.subr.mxu0 0.0
    %264 = vmatpush1.msra.mxu0 0.0
    %265 = vmatprep.mubr.f32.mxu0 0.0
    %266 = vmatmul.mubr.f32.gmra.mrb[0].mxu0 %v127
    %v267 = vpop.f32.mrb[0].mxu0
    %v268 = vadd.f32 0.0, %v267
    %v269 = vpop.f32.mrb[0].mxu0
    %v270 = vadd.f32 0.0, %v269
    %271 = vmatprep.mubr.f32.mxu0 0.0
    %272 = vmatmul.mubr.f32.gmra.mrb[0].mxu0 %v128
    %v273 = vpop.f32.mrb[0].mxu0
    %v274 = vadd.f32 0.0, %v273
    %v275 = vpop.f32.mrb[0].mxu0
    %v276 = vadd.f32 0.0, %v275
    %277 = vmatprep.mubr.f32.mxu0 0.0
    %278 = vmatmul.mubr.f32.gmra.mrb[0].mxu0 %v129
    %v279 = vpop.f32.mrb[0].mxu0
    %v280 = vadd.f32 0.0, %v279
    %v281 = vpop.f32.mrb[0].mxu0
    %v282 = vadd.f32 0.0, %v281
    %283 = vmatprep.mubr.f32.mxu0 0.0
    %284 = vmatmul.mubr.f32.gmra.mrb[0].mxu0 %v130
    %v285 = vpop.f32.mrb[0].mxu0
    %v286 = vadd.f32 0.0, %v285
    %v287 = vpop.f32.mrb[0].mxu0
    %v288 = vadd.f32 0.0, %v287
    %289 = vmatprep.mubr.f32.mxu0 0.0
    %290 = vmatmul.mubr.f32.gmra.mrb[0].mxu0 %v131
    %v291 = vpop.f32.mrb[0].mxu0
    %v292 = vadd.f32 0.0, %v291
    %v293 = vpop.f32.mrb[0].mxu0
    %v294 = vadd.f32 0.0, %v293
    %295 = vdwg.mxu0
    %296 = vmatprep.subr.mxu0 %v140
    %297 = vmatpush1.msra.mxu0 %v139
    %298 = vmatprep.subr.mxu0 %v144
    %299 = vmatpush1.msra.mxu0 %v143
    %300 = vmatprep.subr.mxu0 %v148
    %301 = vmatpush1.msra.mxu0 %v147
    %302 = vmatprep.subr.mxu0 %v152
    %303 = vmatpush1.msra.mxu0 %v151
    %304 = vmatprep.subr.mxu0 %v156
    %305 = vmatpush1.msra.mxu0 %v155
    %306 = vmatprep.subr.mxu0 %v160
    %307 = vmatpush1.msra.mxu0 %v159
    %308 = vmatprep.subr.mxu0 %v164
    %309 = vmatpush1.msra.mxu0 %v163
    %310 = vmatprep.subr.mxu0 %v168
    %311 = vmatpush1.msra.mxu0 %v167
    %312 = vmatprep.subr.mxu0 %v172
    %313 = vmatpush1.msra.mxu0 %v171
    %314 = vmatprep.subr.mxu0 %v176
    %315 = vmatpush1.msra.mxu0 %v175
    %316 = vmatprep.subr.mxu0 %v180
    %317 = vmatpush1.msra.mxu0 %v179
    %318 = vmatprep.subr.mxu0 %v184
    %319 = vmatpush1.msra.mxu0 %v183
    %320 = vmatprep.subr.mxu0 %v188
    %321 = vmatpush1.msra.mxu0 %v187
    %322 = vmatprep.subr.mxu0 %v192
    %323 = vmatpush1.msra.mxu0 %v191
    %324 = vmatprep.subr.mxu0 %v196
    %325 = vmatpush1.msra.mxu0 %v195
    %326 = vmatprep.subr.mxu0 %v200
    %327 = vmatpush1.msra.mxu0 %v199
    %328 = vmatprep.subr.mxu0 0.0
    %329 = vmatpush1.msra.mxu0 0.0
    %330 = vmatprep.subr.mxu0 0.0
    %331 = vmatpush1.msra.mxu0 0.0
    %332 = vmatprep.subr.mxu0 0.0
    %333 = vmatpush1.msra.mxu0 0.0
    %334 = vmatprep.subr.mxu0 0.0
    %335 = vmatpush1.msra.mxu0 0.0
    %336 = vmatprep.subr.mxu0 0.0
    %337 = vmatpush1.msra.mxu0 0.0
    %338 = vmatprep.subr.mxu0 0.0
    %339 = vmatpush1.msra.mxu0 0.0
    %340 = vmatprep.subr.mxu0 0.0
    %341 = vmatpush1.msra.mxu0 0.0
    %342 = vmatprep.subr.mxu0 0.0
    %343 = vmatpush1.msra.mxu0 0.0
    %344 = vmatprep.subr.mxu0 0.0
    %345 = vmatpush1.msra.mxu0 0.0
    %346 = vmatprep.subr.mxu0 0.0
    %347 = vmatpush1.msra.mxu0 0.0
    %348 = vmatprep.subr.mxu0 0.0
    %349 = vmatpush1.msra.mxu0 0.0
    %350 = vmatprep.subr.mxu0 0.0
    %351 = vmatpush1.msra.mxu0 0.0
    %352 = vmatprep.subr.mxu0 0.0
    %353 = vmatpush1.msra.mxu0 0.0
    %354 = vmatprep.subr.mxu0 0.0
    %355 = vmatpush1.msra.mxu0 0.0
    %356 = vmatprep.subr.mxu0 0.0
    %357 = vmatpush1.msra.mxu0 0.0
    %358 = vmatprep.subr.mxu0 0.0
    %359 = vmatpush1.msra.mxu0 0.0
    %360 = vmatprep.mubr.f32.mxu0 0.0
    %361 = vmatmul.mubr.f32.gmra.mrb[0].mxu0 %v127
    %v362 = vpop.f32.mrb[0].mxu0
    %v363 = vadd.f32 0.0, %v362
    %v364 = vpop.f32.mrb[0].mxu0
    %v365 = vadd.f32 0.0, %v364
    %366 = vmatprep.mubr.f32.mxu0 0.0
    %367 = vmatmul.mubr.f32.gmra.mrb[0].mxu0 %v128
    %v368 = vpop.f32.mrb[0].mxu0
    %v369 = vadd.f32 0.0, %v368
    %v370 = vpop.f32.mrb[0].mxu0
    %v371 = vadd.f32 0.0, %v370
    %372 = vmatprep.mubr.f32.mxu0 0.0
    %373 = vmatmul.mubr.f32.gmra.mrb[0].mxu0 %v129
    %v374 = vpop.f32.mrb[0].mxu0
    %v375 = vadd.f32 0.0, %v374
    %v376 = vpop.f32.mrb[0].mxu0
    %v377 = vadd.f32 0.0, %v376
    %378 = vmatprep.mubr.f32.mxu0 0.0
    %379 = vmatmul.mubr.f32.gmra.mrb[0].mxu0 %v130
    %v380 = vpop.f32.mrb[0].mxu0
    %v381 = vadd.f32 0.0, %v380
    %v382 = vpop.f32.mrb[0].mxu0
    %v383 = vadd.f32 0.0, %v382
    %384 = vmatprep.mubr.f32.mxu0 0.0
    %385 = vmatmul.mubr.f32.gmra.mrb[0].mxu0 %v131
    %v386 = vpop.f32.mrb[0].mxu0
    %v387 = vadd.f32 0.0, %v386
    %v388 = vpop.f32.mrb[0].mxu0
    %v389 = vadd.f32 0.0, %v388
    %390 = vdwg.mxu0
    %v391 = vld [vmem:[#allocation7] sm:$0xff]
    %v392 = vld [vmem:[#allocation7 + $0x8] sm:$0xff]
    %v393 = vld [vmem:[#allocation7 + $0x10] sm:$0xff]
    %v394 = vld [vmem:[#allocation7 + $0x18] sm:$0xff]
    %v395 = vld [vmem:[#allocation7 + $0x20] sm:$0xff]
    %v396 = vld [vmem:[#allocation7 + $0x28] sm:$0xff]
    %v397 = vld [vmem:[#allocation7 + $0x30] sm:$0xff]
    %v398 = vld [vmem:[#allocation7 + $0x38] sm:$0xff]
    %v399 = vld [vmem:[#allocation7 + $0x40] sm:$0xff]
    %v400 = vld [vmem:[#allocation7 + $0x48] sm:$0xff]
    %v401 = vld [vmem:[#allocation7 + $0x50] sm:$0xff]
    %v402 = vld [vmem:[#allocation7 + $0x58] sm:$0xff]
    %v403 = vld [vmem:[#allocation7 + $0x60] sm:$0xff]
    %v404 = vld [vmem:[#allocation7 + $0x68] sm:$0xff]
    %v405 = vld [vmem:[#allocation7 + $0x70] sm:$0xff]
    %v406 = vld [vmem:[#allocation7 + $0x78] sm:$0xff]
    %v407 = vld [vmem:[#allocation7 + $0x80] sm:$0xff]
    %v408 = vld [vmem:[#allocation7 + $0x88] sm:$0xff]
    %v409 = vld [vmem:[#allocation7 + $0x90] sm:$0xff]
    %v410 = vld [vmem:[#allocation7 + $0x98] sm:$0xff]
    %v411 = vld [vmem:[#allocation7 + $0xa0] sm:$0xff]
    %v412 = vld [vmem:[#allocation7 + $0xa8] sm:$0xff]
    %v413 = vld [vmem:[#allocation7 + $0xb0] sm:$0xff]
    %v414 = vld [vmem:[#allocation7 + $0xb8] sm:$0xff]
    %v415 = vld [vmem:[#allocation7 + $0xc0] sm:$0xff]
    %v416 = vld [vmem:[#allocation7 + $0xc8] sm:$0xff]
    %v417 = vld [vmem:[#allocation7 + $0xd0] sm:$0xff]
    %v418 = vld [vmem:[#allocation7 + $0xd8] sm:$0xff]
    %v419 = vld [vmem:[#allocation7 + $0xe0] sm:$0xff]
    %v420 = vld [vmem:[#allocation7 + $0xe8] sm:$0xff]
    %v421 = vld [vmem:[#allocation7 + $0xf0] sm:$0xff]
    %v422 = vld [vmem:[#allocation7 + $0xf8] sm:$0xff]
    %v423 = vld [vmem:[#allocation7 + $0x100] sm:$0xff]
    %v424 = vld [vmem:[#allocation7 + $0x108] sm:$0xff]
    %v425 = vld [vmem:[#allocation7 + $0x110] sm:$0xff]
    %v426 = vld [vmem:[#allocation7 + $0x118] sm:$0xff]
    %v427 = vld [vmem:[#allocation7 + $0x120] sm:$0xff]
    %v428 = vld [vmem:[#allocation7 + $0x128] sm:$0xff]
    %v429 = vld [vmem:[#allocation7 + $0x130] sm:$0xff]
    %v430 = vld [vmem:[#allocation7 + $0x138] sm:$0xff]
    %v431 = vld [vmem:[#allocation7 + $0x140] sm:$0xff]
    %v432 = vld [vmem:[#allocation7 + $0x148] sm:$0xff]
    %v433 = vld [vmem:[#allocation7 + $0x150] sm:$0xff]
    %v434 = vld [vmem:[#allocation7 + $0x158] sm:$0xff]
    %v435 = vld [vmem:[#allocation7 + $0x160] sm:$0xff]
    %v436 = vld [vmem:[#allocation7 + $0x168] sm:$0xff]
    %v437 = vld [vmem:[#allocation7 + $0x170] sm:$0xff]
    %v438 = vld [vmem:[#allocation7 + $0x178] sm:$0xff]
    %v439 = vld [vmem:[#allocation7 + $0x180] sm:$0xff]
    %v440 = vld [vmem:[#allocation7 + $0x188] sm:$0xff]
    %v441 = vld [vmem:[#allocation7 + $0x190] sm:$0xff]
    %v442 = vld [vmem:[#allocation7 + $0x198] sm:$0xff]
    %v443 = vld [vmem:[#allocation7 + $0x1a0] sm:$0xff]
    %v444 = vld [vmem:[#allocation7 + $0x1a8] sm:$0xff]
    %v445 = vld [vmem:[#allocation7 + $0x1b0] sm:$0xff]
    %v446 = vld [vmem:[#allocation7 + $0x1b8] sm:$0xff]
    %v447 = vld [vmem:[#allocation7 + $0x1c0] sm:$0xff]
    %v448 = vld [vmem:[#allocation7 + $0x1c8] sm:$0xff]
    %v449 = vld [vmem:[#allocation7 + $0x1d0] sm:$0xff]
    %v450 = vld [vmem:[#allocation7 + $0x1d8] sm:$0xff]
    %v451 = vld [vmem:[#allocation7 + $0x1e0] sm:$0xff]
    %v452 = vld [vmem:[#allocation7 + $0x1e8] sm:$0xff]
    %v453 = vld [vmem:[#allocation7 + $0x1f0] sm:$0xff]
    %v454 = vld [vmem:[#allocation7 + $0x1f8] sm:$0xff]
    %455 = vmatprep.subr.mxu0 %v392
    %456 = vmatpush1.msra.mxu0 %v391
    %457 = vmatprep.subr.mxu0 %v396
    %458 = vmatpush1.msra.mxu0 %v395
    %459 = vmatprep.subr.mxu0 %v400
    %460 = vmatpush1.msra.mxu0 %v399
    %461 = vmatprep.subr.mxu0 %v404
    %462 = vmatpush1.msra.mxu0 %v403
    %463 = vmatprep.subr.mxu0 %v408
    %464 = vmatpush1.msra.mxu0 %v407
    %465 = vmatprep.subr.mxu0 %v412
    %466 = vmatpush1.msra.mxu0 %v411
    %467 = vmatprep.subr.mxu0 %v416
    %468 = vmatpush1.msra.mxu0 %v415
    %469 = vmatprep.subr.mxu0 %v420
    %470 = vmatpush1.msra.mxu0 %v419
    %471 = vmatprep.subr.mxu0 %v424
    %472 = vmatpush1.msra.mxu0 %v423
    %473 = vmatprep.subr.mxu0 %v428
    %474 = vmatpush1.msra.mxu0 %v427
    %475 = vmatprep.subr.mxu0 %v432
    %476 = vmatpush1.msra.mxu0 %v431
    %477 = vmatprep.subr.mxu0 %v436
    %478 = vmatpush1.msra.mxu0 %v435
    %479 = vmatprep.subr.mxu0 %v440
    %480 = vmatpush1.msra.mxu0 %v439
    %481 = vmatprep.subr.mxu0 %v444
    %482 = vmatpush1.msra.mxu0 %v443
    %483 = vmatprep.subr.mxu0 %v448
    %484 = vmatpush1.msra.mxu0 %v447
    %485 = vmatprep.subr.mxu0 %v452
    %486 = vmatpush1.msra.mxu0 %v451
    %487 = vmatprep.subr.mxu0 0.0
    %488 = vmatpush1.msra.mxu0 0.0
    %489 = vmatprep.subr.mxu0 0.0
    %490 = vmatpush1.msra.mxu0 0.0
    %491 = vmatprep.subr.mxu0 0.0
    %492 = vmatpush1.msra.mxu0 0.0
    %493 = vmatprep.subr.mxu0 0.0
    %494 = vmatpush1.msra.mxu0 0.0
    %495 = vmatprep.subr.mxu0 0.0
    %496 = vmatpush1.msra.mxu0 0.0
    %497 = vmatprep.subr.mxu0 0.0
    %498 = vmatpush1.msra.mxu0 0.0
    %499 = vmatprep.subr.mxu0 0.0
    %500 = vmatpush1.msra.mxu0 0.0
    %501 = vmatprep.subr.mxu0 0.0
    %502 = vmatpush1.msra.mxu0 0.0
    %503 = vmatprep.subr.mxu0 0.0
    %504 = vmatpush1.msra.mxu0 0.0
    %505 = vmatprep.subr.mxu0 0.0
    %506 = vmatpush1.msra.mxu0 0.0
    %507 = vmatprep.subr.mxu0 0.0
    %508 = vmatpush1.msra.mxu0 0.0
    %509 = vmatprep.subr.mxu0 0.0
    %510 = vmatpush1.msra.mxu0 0.0
    %511 = vmatprep.subr.mxu0 0.0
    %512 = vmatpush1.msra.mxu0 0.0
    %513 = vmatprep.subr.mxu0 0.0
    %514 = vmatpush1.msra.mxu0 0.0
    %515 = vmatprep.subr.mxu0 0.0
    %516 = vmatpush1.msra.mxu0 0.0
    %517 = vmatprep.subr.mxu0 0.0
    %518 = vmatpush1.msra.mxu0 0.0
    %519 = vmatprep.mubr.f32.mxu0 0.0
    %520 = vmatmul.mubr.f32.gmra.mrb[0].mxu0 %v132
    %v521 = vpop.f32.mrb[0].mxu0
    %v522 = vadd.f32 0.0, %v521
    %v523 = vpop.f32.mrb[0].mxu0
    %v524 = vadd.f32 0.0, %v523
    %525 = vmatprep.mubr.f32.mxu0 0.0
    %526 = vmatmul.mubr.f32.gmra.mrb[0].mxu0 %v133
    %v527 = vpop.f32.mrb[0].mxu0
    %v528 = vadd.f32 0.0, %v527
    %v529 = vpop.f32.mrb[0].mxu0
    %v530 = vadd.f32 0.0, %v529
    %531 = vmatprep.mubr.f32.mxu0 0.0
    %532 = vmatmul.mubr.f32.gmra.mrb[0].mxu0 %v134
    %v533 = vpop.f32.mrb[0].mxu0
    %v534 = vadd.f32 0.0, %v533
    %v535 = vpop.f32.mrb[0].mxu0
    %v536 = vadd.f32 0.0, %v535
    %537 = vmatprep.mubr.f32.mxu0 0.0
    %538 = vmatmul.mubr.f32.gmra.mrb[0].mxu0 %v135
    %v539 = vpop.f32.mrb[0].mxu0
    %v540 = vadd.f32 0.0, %v539
    %v541 = vpop.f32.mrb[0].mxu0
    %v542 = vadd.f32 0.0, %v541
    %543 = vmatprep.mubr.f32.mxu0 0.0
    %544 = vmatmul.mubr.f32.gmra.mrb[0].mxu0 %v136
    %v545 = vpop.f32.mrb[0].mxu0
    %v546 = vadd.f32 0.0, %v545
    %v547 = vpop.f32.mrb[0].mxu0
    %v548 = vadd.f32 0.0, %v547
    %549 = vdwg.mxu0
    %550 = vmatprep.subr.mxu0 %v394
    %551 = vmatpush1.msra.mxu0 %v393
    %552 = vmatprep.subr.mxu0 %v398
    %553 = vmatpush1.msra.mxu0 %v397
    %554 = vmatprep.subr.mxu0 %v402
    %555 = vmatpush1.msra.mxu0 %v401
    %556 = vmatprep.subr.mxu0 %v406
    %557 = vmatpush1.msra.mxu0 %v405
    %558 = vmatprep.subr.mxu0 %v410
    %559 = vmatpush1.msra.mxu0 %v409
    %560 = vmatprep.subr.mxu0 %v414
    %561 = vmatpush1.msra.mxu0 %v413
    %562 = vmatprep.subr.mxu0 %v418
    %563 = vmatpush1.msra.mxu0 %v417
    %564 = vmatprep.subr.mxu0 %v422
    %565 = vmatpush1.msra.mxu0 %v421
    %566 = vmatprep.subr.mxu0 %v426
    %567 = vmatpush1.msra.mxu0 %v425
    %568 = vmatprep.subr.mxu0 %v430
    %569 = vmatpush1.msra.mxu0 %v429
    %570 = vmatprep.subr.mxu0 %v434
    %571 = vmatpush1.msra.mxu0 %v433
    %572 = vmatprep.subr.mxu0 %v438
    %573 = vmatpush1.msra.mxu0 %v437
    %574 = vmatprep.subr.mxu0 %v442
    %575 = vmatpush1.msra.mxu0 %v441
    %576 = vmatprep.subr.mxu0 %v446
    %577 = vmatpush1.msra.mxu0 %v445
    %578 = vmatprep.subr.mxu0 %v450
    %579 = vmatpush1.msra.mxu0 %v449
    %580 = vmatprep.subr.mxu0 %v454
    %581 = vmatpush1.msra.mxu0 %v453
    %582 = vmatprep.subr.mxu0 0.0
    %583 = vmatpush1.msra.mxu0 0.0
    %584 = vmatprep.subr.mxu0 0.0
    %585 = vmatpush1.msra.mxu0 0.0
    %586 = vmatprep.subr.mxu0 0.0
    %587 = vmatpush1.msra.mxu0 0.0
    %588 = vmatprep.subr.mxu0 0.0
    %589 = vmatpush1.msra.mxu0 0.0
    %590 = vmatprep.subr.mxu0 0.0
    %591 = vmatpush1.msra.mxu0 0.0
    %592 = vmatprep.subr.mxu0 0.0
    %593 = vmatpush1.msra.mxu0 0.0
    %594 = vmatprep.subr.mxu0 0.0
    %595 = vmatpush1.msra.mxu0 0.0
    %596 = vmatprep.subr.mxu0 0.0
    %597 = vmatpush1.msra.mxu0 0.0
    %598 = vmatprep.subr.mxu0 0.0
    %599 = vmatpush1.msra.mxu0 0.0
    %600 = vmatprep.subr.mxu0 0.0
    %601 = vmatpush1.msra.mxu0 0.0
    %602 = vmatprep.subr.mxu0 0.0
    %603 = vmatpush1.msra.mxu0 0.0
    %604 = vmatprep.subr.mxu0 0.0
    %605 = vmatpush1.msra.mxu0 0.0
    %606 = vmatprep.subr.mxu0 0.0
    %607 = vmatpush1.msra.mxu0 0.0
    %608 = vmatprep.subr.mxu0 0.0
    %609 = vmatpush1.msra.mxu0 0.0
    %610 = vmatprep.subr.mxu0 0.0
    %611 = vmatpush1.msra.mxu0 0.0
    %612 = vmatprep.subr.mxu0 0.0
    %613 = vmatpush1.msra.mxu0 0.0
    %614 = vmatprep.mubr.f32.mxu0 0.0
    %615 = vmatmul.mubr.f32.gmra.mrb[0].mxu0 %v132
    %v616 = vpop.f32.mrb[0].mxu0
    %v617 = vadd.f32 0.0, %v616
    %v618 = vpop.f32.mrb[0].mxu0
    %v619 = vadd.f32 0.0, %v618
    %620 = vmatprep.mubr.f32.mxu0 0.0
    %621 = vmatmul.mubr.f32.gmra.mrb[0].mxu0 %v133
    %v622 = vpop.f32.mrb[0].mxu0
    %v623 = vadd.f32 0.0, %v622
    %v624 = vpop.f32.mrb[0].mxu0
    %v625 = vadd.f32 0.0, %v624
    %626 = vmatprep.mubr.f32.mxu0 0.0
    %627 = vmatmul.mubr.f32.gmra.mrb[0].mxu0 %v134
    %v628 = vpop.f32.mrb[0].mxu0
    %v629 = vadd.f32 0.0, %v628
    %v630 = vpop.f32.mrb[0].mxu0
    %v631 = vadd.f32 0.0, %v630
    %632 = vmatprep.mubr.f32.mxu0 0.0
    %633 = vmatmul.mubr.f32.gmra.mrb[0].mxu0 %v135
    %v634 = vpop.f32.mrb[0].mxu0
    %v635 = vadd.f32 0.0, %v634
    %v636 = vpop.f32.mrb[0].mxu0
    %v637 = vadd.f32 0.0, %v636
    %638 = vmatprep.mubr.f32.mxu0 0.0
    %639 = vmatmul.mubr.f32.gmra.mrb[0].mxu0 %v136
    %v640 = vpop.f32.mrb[0].mxu0
    %v641 = vadd.f32 0.0, %v640
    %v642 = vpop.f32.mrb[0].mxu0
    %v643 = vadd.f32 0.0, %v642
    %644 = vdwg.mxu0
    %v645 = vmul.f32 %v268, %v522
    %v646 = vmul.f32 %v270, %v524
    %v647 = vmul.f32 %v274, %v528
    %v648 = vmul.f32 %v276, %v530
    %v649 = vmul.f32 %v280, %v534
    %v650 = vmul.f32 %v282, %v536
    %v651 = vmul.f32 %v286, %v540
    %v652 = vmul.f32 %v288, %v542
    %v653 = vmul.f32 %v292, %v546
    %v654 = vmul.f32 %v294, %v548
    %v655 = vld [vmem:[#allocation8] sm:$0xff]
    %v656 = vld [vmem:[#allocation8 + $0x8] sm:$0xff]
    %v657 = vld [vmem:[#allocation8 + $0x10] sm:$0xff]
    %v658 = vld [vmem:[#allocation8 + $0x18] sm:$0xff]
    %v659 = vld [vmem:[#allocation8 + $0x20] sm:$0xff]
    %v660 = vld [vmem:[#allocation8 + $0x28] sm:$0xff]
    %v661 = vld [vmem:[#allocation8 + $0x30] sm:$0xff]
    %v662 = vld [vmem:[#allocation8 + $0x38] sm:$0xff]
    %v663 = vld [vmem:[#allocation8 + $0x40] sm:$0xff]
    %v664 = vld [vmem:[#allocation8 + $0x48] sm:$0xff]
    %v665 = vld [vmem:[#allocation8 + $0x50] sm:$0xff]
    %v666 = vld [vmem:[#allocation8 + $0x58] sm:$0xff]
    %v667 = vld [vmem:[#allocation8 + $0x60] sm:$0xff]
    %v668 = vld [vmem:[#allocation8 + $0x68] sm:$0xff]
    %v669 = vld [vmem:[#allocation8 + $0x70] sm:$0xff]
    %v670 = vld [vmem:[#allocation8 + $0x78] sm:$0xff]
    %v671 = vld [vmem:[#allocation8 + $0x80] sm:$0xff]
    %v672 = vld [vmem:[#allocation8 + $0x88] sm:$0xff]
    %v673 = vld [vmem:[#allocation8 + $0x90] sm:$0xff]
    %v674 = vld [vmem:[#allocation8 + $0x98] sm:$0xff]
    %v675 = vld [vmem:[#allocation8 + $0xa0] sm:$0xff]
    %v676 = vld [vmem:[#allocation8 + $0xa8] sm:$0xff]
    %v677 = vld [vmem:[#allocation8 + $0xb0] sm:$0xff]
    %v678 = vld [vmem:[#allocation8 + $0xb8] sm:$0xff]
    %v679 = vld [vmem:[#allocation8 + $0xc0] sm:$0xff]
    %v680 = vld [vmem:[#allocation8 + $0xc8] sm:$0xff]
    %v681 = vld [vmem:[#allocation8 + $0xd0] sm:$0xff]
    %v682 = vld [vmem:[#allocation8 + $0xd8] sm:$0xff]
    %v683 = vld [vmem:[#allocation8 + $0xe0] sm:$0xff]
    %v684 = vld [vmem:[#allocation8 + $0xe8] sm:$0xff]
    %v685 = vld [vmem:[#allocation8 + $0xf0] sm:$0xff]
    %v686 = vld [vmem:[#allocation8 + $0xf8] sm:$0xff]
    %v687 = vld [vmem:[#allocation8 + $0x100] sm:$0xff]
    %v688 = vld [vmem:[#allocation8 + $0x108] sm:$0xff]
    %v689 = vld [vmem:[#allocation8 + $0x110] sm:$0xff]
    %v690 = vld [vmem:[#allocation8 + $0x118] sm:$0xff]
    %v691 = vld [vmem:[#allocation8 + $0x120] sm:$0xff]
    %v692 = vld [vmem:[#allocation8 + $0x128] sm:$0xff]
    %v693 = vld [vmem:[#allocation8 + $0x130] sm:$0xff]
    %v694 = vld [vmem:[#allocation8 + $0x138] sm:$0xff]
    %v695 = vld [vmem:[#allocation8 + $0x140] sm:$0xff]
    %v696 = vld [vmem:[#allocation8 + $0x148] sm:$0xff]
    %v697 = vld [vmem:[#allocation8 + $0x150] sm:$0xff]
    %v698 = vld [vmem:[#allocation8 + $0x158] sm:$0xff]
    %v699 = vld [vmem:[#allocation8 + $0x160] sm:$0xff]
    %v700 = vld [vmem:[#allocation8 + $0x168] sm:$0xff]
    %v701 = vld [vmem:[#allocation8 + $0x170] sm:$0xff]
    %v702 = vld [vmem:[#allocation8 + $0x178] sm:$0xff]
    %v703 = vld [vmem:[#allocation8 + $0x180] sm:$0xff]
    %v704 = vld [vmem:[#allocation8 + $0x188] sm:$0xff]
    %v705 = vld [vmem:[#allocation8 + $0x190] sm:$0xff]
    %v706 = vld [vmem:[#allocation8 + $0x198] sm:$0xff]
    %v707 = vld [vmem:[#allocation8 + $0x1a0] sm:$0xff]
    %v708 = vld [vmem:[#allocation8 + $0x1a8] sm:$0xff]
    %v709 = vld [vmem:[#allocation8 + $0x1b0] sm:$0xff]
    %v710 = vld [vmem:[#allocation8 + $0x1b8] sm:$0xff]
    %v711 = vld [vmem:[#allocation8 + $0x1c0] sm:$0xff]
    %v712 = vld [vmem:[#allocation8 + $0x1c8] sm:$0xff]
    %v713 = vld [vmem:[#allocation8 + $0x1d0] sm:$0xff]
    %v714 = vld [vmem:[#allocation8 + $0x1d8] sm:$0xff]
    %v715 = vld [vmem:[#allocation8 + $0x1e0] sm:$0xff]
    %v716 = vld [vmem:[#allocation8 + $0x1e8] sm:$0xff]
    %v717 = vld [vmem:[#allocation8 + $0x1f0] sm:$0xff]
    %v718 = vld [vmem:[#allocation8 + $0x1f8] sm:$0xff]
    %v719 = vld [vmem:[%s7] sm:$0x3]
    %v721 = vlaneseq
    %v722 = vshrl.u32 %v721, 7
    %v723 = vsub.s32 0, %v722
    %v724 = vrot.slane %v719, %v723
    %v725 = vlaneseq
    %v726 = vshrl.u32 %v725, 7
    %v727 = vsub.s32 1, %v726
    %v728 = vrot.slane %v719, %v727
    %731 = vmatprep.subr.mxu0 %v656
    %732 = vmatpush1.msra.mxu0 %v655
    %733 = vmatprep.subr.mxu0 %v658
    %734 = vmatpush1.msra.mxu0 %v657
    %735 = vmatprep.subr.mxu0 %v660
    %736 = vmatpush1.msra.mxu0 %v659
    %737 = vmatprep.subr.mxu0 %v662
    %738 = vmatpush1.msra.mxu0 %v661
    %739 = vmatprep.subr.mxu0 %v664
    %740 = vmatpush1.msra.mxu0 %v663
    %741 = vmatprep.subr.mxu0 %v666
    %742 = vmatpush1.msra.mxu0 %v665
    %743 = vmatprep.subr.mxu0 %v668
    %744 = vmatpush1.msra.mxu0 %v667
    %745 = vmatprep.subr.mxu0 %v670
    %746 = vmatpush1.msra.mxu0 %v669
    %747 = vmatprep.subr.mxu0 %v672
    %748 = vmatpush1.msra.mxu0 %v671
    %749 = vmatprep.subr.mxu0 %v674
    %750 = vmatpush1.msra.mxu0 %v673
    %751 = vmatprep.subr.mxu0 %v676
    %752 = vmatpush1.msra.mxu0 %v675
    %753 = vmatprep.subr.mxu0 %v678
    %754 = vmatpush1.msra.mxu0 %v677
    %755 = vmatprep.subr.mxu0 %v680
    %756 = vmatpush1.msra.mxu0 %v679
    %757 = vmatprep.subr.mxu0 %v682
    %758 = vmatpush1.msra.mxu0 %v681
    %759 = vmatprep.subr.mxu0 %v684
    %760 = vmatpush1.msra.mxu0 %v683
    %761 = vmatprep.subr.mxu0 %v686
    %762 = vmatpush1.msra.mxu0 %v685
    %763 = vmatprep.subr.mxu0 %v688
    %764 = vmatpush1.msra.mxu0 %v687
    %765 = vmatprep.subr.mxu0 %v690
    %766 = vmatpush1.msra.mxu0 %v689
    %767 = vmatprep.subr.mxu0 %v692
    %768 = vmatpush1.msra.mxu0 %v691
    %769 = vmatprep.subr.mxu0 %v694
    %770 = vmatpush1.msra.mxu0 %v693
    %771 = vmatprep.subr.mxu0 %v696
    %772 = vmatpush1.msra.mxu0 %v695
    %773 = vmatprep.subr.mxu0 %v698
    %774 = vmatpush1.msra.mxu0 %v697
    %775 = vmatprep.subr.mxu0 %v700
    %776 = vmatpush1.msra.mxu0 %v699
    %777 = vmatprep.subr.mxu0 %v702
    %778 = vmatpush1.msra.mxu0 %v701
    %779 = vmatprep.subr.mxu0 %v704
    %780 = vmatpush1.msra.mxu0 %v703
    %781 = vmatprep.subr.mxu0 %v706
    %782 = vmatpush1.msra.mxu0 %v705
    %783 = vmatprep.subr.mxu0 %v708
    %784 = vmatpush1.msra.mxu0 %v707
    %785 = vmatprep.subr.mxu0 %v710
    %786 = vmatpush1.msra.mxu0 %v709
    %787 = vmatprep.subr.mxu0 %v712
    %788 = vmatpush1.msra.mxu0 %v711
    %789 = vmatprep.subr.mxu0 %v714
    %790 = vmatpush1.msra.mxu0 %v713
    %791 = vmatprep.subr.mxu0 %v716
    %792 = vmatpush1.msra.mxu0 %v715
    %793 = vmatprep.subr.mxu0 %v718
    %794 = vmatpush1.msra.mxu0 %v717
    %795 = vmatprep.mubr.f32.mxu0 %v646
    %796 = vmatmul.mubr.f32.gmra.mrb[0].mxu0 %v645
    %v797 = vpop.f32.mrb[0].mxu0
    %v798 = vadd.f32 %v724, %v797
    %v799 = vpop.f32.mrb[0].mxu0
    %v800 = vadd.f32 %v728, %v799
    %801 = vmatprep.mubr.f32.mxu0 %v648
    %802 = vmatmul.mubr.f32.gmra.mrb[0].mxu0 %v647
    %v803 = vpop.f32.mrb[0].mxu0
    %v804 = vadd.f32 %v724, %v803
    %v805 = vpop.f32.mrb[0].mxu0
    %v806 = vadd.f32 %v728, %v805
    %807 = vmatprep.mubr.f32.mxu0 %v650
    %808 = vmatmul.mubr.f32.gmra.mrb[0].mxu0 %v649
    %v809 = vpop.f32.mrb[0].mxu0
    %v810 = vadd.f32 %v724, %v809
    %v811 = vpop.f32.mrb[0].mxu0
    %v812 = vadd.f32 %v728, %v811
    %813 = vmatprep.mubr.f32.mxu0 %v652
    %814 = vmatmul.mubr.f32.gmra.mrb[0].mxu0 %v651
    %v815 = vpop.f32.mrb[0].mxu0
    %v816 = vadd.f32 %v724, %v815
    %v817 = vpop.f32.mrb[0].mxu0
    %v818 = vadd.f32 %v728, %v817
    %819 = vmatprep.mubr.f32.mxu0 %v654
    %820 = vmatmul.mubr.f32.gmra.mrb[0].mxu0 %v653
    %v821 = vpop.f32.mrb[0].mxu0
    %v822 = vadd.f32 %v724, %v821
    %v823 = vpop.f32.mrb[0].mxu0
    %v824 = vadd.f32 %v728, %v823
    %825 = vdwg.mxu0
    %v826 = vmax.f32 %v798, 0.0
    %v827 = vmax.f32 %v800, 0.0
    %v828 = vmax.f32 %v804, 0.0
    %v829 = vmax.f32 %v806, 0.0
    %v830 = vmax.f32 %v810, 0.0
    %v831 = vmax.f32 %v812, 0.0
    %v832 = vmax.f32 %v816, 0.0
    %v833 = vmax.f32 %v818, 0.0
    %v834 = vmax.f32 %v822, 0.0
    %v835 = vmax.f32 %v824, 0.0
    %v836 = vld [vmem:[#allocation10] sm:$0xff]
    %v837 = vld [vmem:[#allocation10 + $0x8] sm:$0xff]
    %v838 = vld [vmem:[#allocation10 + $0x10] sm:$0xff]
    %v839 = vld [vmem:[#allocation10 + $0x18] sm:$0xff]
    %v840 = vld [vmem:[#allocation10 + $0x20] sm:$0xff]
    %v841 = vld [vmem:[#allocation10 + $0x28] sm:$0xff]
    %v842 = vld [vmem:[#allocation10 + $0x30] sm:$0xff]
    %v843 = vld [vmem:[#allocation10 + $0x38] sm:$0xff]
    %v844 = vld [vmem:[#allocation10 + $0x40] sm:$0xff]
    %v845 = vld [vmem:[#allocation10 + $0x48] sm:$0xff]
    %v846 = vld [vmem:[#allocation10 + $0x50] sm:$0xff]
    %v847 = vld [vmem:[#allocation10 + $0x58] sm:$0xff]
    %v848 = vld [vmem:[#allocation10 + $0x60] sm:$0xff]
    %v849 = vld [vmem:[#allocation10 + $0x68] sm:$0xff]
    %v850 = vld [vmem:[#allocation10 + $0x70] sm:$0xff]
    %v851 = vld [vmem:[#allocation10 + $0x78] sm:$0xff]
    %v852 = vld [vmem:[#allocation10 + $0x80] sm:$0xff]
    %v853 = vld [vmem:[#allocation10 + $0x88] sm:$0xff]
    %v854 = vld [vmem:[#allocation10 + $0x90] sm:$0xff]
    %v855 = vld [vmem:[#allocation10 + $0x98] sm:$0xff]
    %v856 = vld [vmem:[#allocation10 + $0xa0] sm:$0xff]
    %v857 = vld [vmem:[#allocation10 + $0xa8] sm:$0xff]
    %v858 = vld [vmem:[#allocation10 + $0xb0] sm:$0xff]
    %v859 = vld [vmem:[#allocation10 + $0xb8] sm:$0xff]
    %v860 = vld [vmem:[#allocation10 + $0xc0] sm:$0xff]
    %v861 = vld [vmem:[#allocation10 + $0xc8] sm:$0xff]
    %v862 = vld [vmem:[#allocation10 + $0xd0] sm:$0xff]
    %v863 = vld [vmem:[#allocation10 + $0xd8] sm:$0xff]
    %v864 = vld [vmem:[#allocation10 + $0xe0] sm:$0xff]
    %v865 = vld [vmem:[#allocation10 + $0xe8] sm:$0xff]
    %v866 = vld [vmem:[#allocation10 + $0xf0] sm:$0xff]
    %v867 = vld [vmem:[#allocation10 + $0xf8] sm:$0xff]
    %v868 = vld [vmem:[%s9] sm:$0x1]
    %v870 = vlaneseq
    %v871 = vshrl.u32 %v870, 7
    %v872 = vsub.s32 0, %v871
    %v873 = vrot.slane %v868, %v872
    %875 = vmatprep.subr.mxu0 0.0
    %876 = vmatpush1.msra.mxu0 %v836
    %877 = vmatprep.subr.mxu0 0.0
    %878 = vmatpush1.msra.mxu0 %v837
    %879 = vmatprep.subr.mxu0 0.0
    %880 = vmatpush1.msra.mxu0 %v838
    %881 = vmatprep.subr.mxu0 0.0
    %882 = vmatpush1.msra.mxu0 %v839
    %883 = vmatprep.subr.mxu0 0.0
    %884 = vmatpush1.msra.mxu0 %v840
    %885 = vmatprep.subr.mxu0 0.0
    %886 = vmatpush1.msra.mxu0 %v841
    %887 = vmatprep.subr.mxu0 0.0
    %888 = vmatpush1.msra.mxu0 %v842
    %889 = vmatprep.subr.mxu0 0.0
    %890 = vmatpush1.msra.mxu0 %v843
    %891 = vmatprep.subr.mxu0 0.0
    %892 = vmatpush1.msra.mxu0 %v844
    %893 = vmatprep.subr.mxu0 0.0
    %894 = vmatpush1.msra.mxu0 %v845
    %895 = vmatprep.subr.mxu0 0.0
    %896 = vmatpush1.msra.mxu0 %v846
    %897 = vmatprep.subr.mxu0 0.0
    %898 = vmatpush1.msra.mxu0 %v847
    %899 = vmatprep.subr.mxu0 0.0
    %900 = vmatpush1.msra.mxu0 %v848
    %901 = vmatprep.subr.mxu0 0.0
    %902 = vmatpush1.msra.mxu0 %v849
    %903 = vmatprep.subr.mxu0 0.0
    %904 = vmatpush1.msra.mxu0 %v850
    %905 = vmatprep.subr.mxu0 0.0
    %906 = vmatpush1.msra.mxu0 %v851
    %907 = vmatprep.subr.mxu0 0.0
    %908 = vmatpush1.msra.mxu0 %v852
    %909 = vmatprep.subr.mxu0 0.0
    %910 = vmatpush1.msra.mxu0 %v853
    %911 = vmatprep.subr.mxu0 0.0
    %912 = vmatpush1.msra.mxu0 %v854
    %913 = vmatprep.subr.mxu0 0.0
    %914 = vmatpush1.msra.mxu0 %v855
    %915 = vmatprep.subr.mxu0 0.0
    %916 = vmatpush1.msra.mxu0 %v856
    %917 = vmatprep.subr.mxu0 0.0
    %918 = vmatpush1.msra.mxu0 %v857
    %919 = vmatprep.subr.mxu0 0.0
    %920 = vmatpush1.msra.mxu0 %v858
    %921 = vmatprep.subr.mxu0 0.0
    %922 = vmatpush1.msra.mxu0 %v859
    %923 = vmatprep.subr.mxu0 0.0
    %924 = vmatpush1.msra.mxu0 %v860
    %925 = vmatprep.subr.mxu0 0.0
    %926 = vmatpush1.msra.mxu0 %v861
    %927 = vmatprep.subr.mxu0 0.0
    %928 = vmatpush1.msra.mxu0 %v862
    %929 = vmatprep.subr.mxu0 0.0
    %930 = vmatpush1.msra.mxu0 %v863
    %931 = vmatprep.subr.mxu0 0.0
    %932 = vmatpush1.msra.mxu0 %v864
    %933 = vmatprep.subr.mxu0 0.0
    %934 = vmatpush1.msra.mxu0 %v865
    %935 = vmatprep.subr.mxu0 0.0
    %936 = vmatpush1.msra.mxu0 %v866
    %937 = vmatprep.subr.mxu0 0.0
    %938 = vmatpush1.msra.mxu0 %v867
    %939 = vmatprep.mubr.f32.mxu0 %v827
    %940 = vmatmul.mubr.f32.gmra.mrb[0].mxu0 %v826
    %v941 = vpop.f32.mrb[0].mxu0
    %v942 = vadd.f32 %v873, %v941
    %v943 = vpop.f32.mrb[0].mxu0
    %944 = vmatprep.mubr.f32.mxu0 %v829
    %945 = vmatmul.mubr.f32.gmra.mrb[0].mxu0 %v828
    %v946 = vpop.f32.mrb[0].mxu0
    %v947 = vadd.f32 %v873, %v946
    %v948 = vpop.f32.mrb[0].mxu0
    %949 = vmatprep.mubr.f32.mxu0 %v831
    %950 = vmatmul.mubr.f32.gmra.mrb[0].mxu0 %v830
    %v951 = vpop.f32.mrb[0].mxu0
    %v952 = vadd.f32 %v873, %v951
    %v953 = vpop.f32.mrb[0].mxu0
    %954 = vmatprep.mubr.f32.mxu0 %v833
    %955 = vmatmul.mubr.f32.gmra.mrb[0].mxu0 %v832
    %v956 = vpop.f32.mrb[0].mxu0
    %v957 = vadd.f32 %v873, %v956
    %v958 = vpop.f32.mrb[0].mxu0
    %959 = vmatprep.mubr.f32.mxu0 %v835
    %960 = vmatmul.mubr.f32.gmra.mrb[0].mxu0 %v834
    %v961 = vpop.f32.mrb[0].mxu0
    %v962 = vadd.f32 %v873, %v961
    %v963 = vpop.f32.mrb[0].mxu0
    %964 = vdwg.mxu0
    %v965 = vadd.f32 %v363, %v617
    %v966 = vadd.f32 %v365, %v619
    %v967 = vadd.f32 %v369, %v623
    %v968 = vadd.f32 %v371, %v625
    %v969 = vadd.f32 %v375, %v629
    %v970 = vadd.f32 %v377, %v631
    %v971 = vadd.f32 %v381, %v635
    %v972 = vadd.f32 %v383, %v637
    %v973 = vadd.f32 %v387, %v641
    %v974 = vadd.f32 %v389, %v643
    %v975 = vld [vmem:[%s2] sm:$0xff]
    %v976 = vld [vmem:[%s2 + $0x8] sm:$0xff]
    %v977 = vld [vmem:[%s2 + $0x10] sm:$0xff]
    %v978 = vld [vmem:[%s2 + $0x18] sm:$0xff]
    %v979 = vld [vmem:[%s2 + $0x20] sm:$0x3f]
    %v980 = vld [vmem:[%s5] sm:$0xff]
    %v981 = vld [vmem:[%s5 + $0x8] sm:$0xff]
    %vm982 = vcmask 64512
    %v984 = vsel %vm982, %v975, 0
    %v987 = vsel %vm982, %v976, 0
    %v990 = vsel %vm982, %v977, 0
    %v993 = vsel %vm982, %v978, 0
    %v996 = vsel %vm982, %v979, 0
    %998 = vmatprep.subr.mxu0 %v981
    %999 = vmatpush1.msra.mxu0 %v980
    %1000 = vmatprep.subr.mxu0 0.0
    %1001 = vmatpush1.msra.mxu0 0.0
    %1002 = vmatprep.subr.mxu0 0.0
    %1003 = vmatpush1.msra.mxu0 0.0
    %1004 = vmatprep.subr.mxu0 0.0
    %1005 = vmatpush1.msra.mxu0 0.0
    %1006 = vmatprep.subr.mxu0 0.0
    %1007 = vmatpush1.msra.mxu0 0.0
    %1008 = vmatprep.subr.mxu0 0.0
    %1009 = vmatpush1.msra.mxu0 0.0
    %1010 = vmatprep.subr.mxu0 0.0
    %1011 = vmatpush1.msra.mxu0 0.0
    %1012 = vmatprep.subr.mxu0 0.0
    %1013 = vmatpush1.msra.mxu0 0.0
    %1014 = vmatprep.subr.mxu0 0.0
    %1015 = vmatpush1.msra.mxu0 0.0
    %1016 = vmatprep.subr.mxu0 0.0
    %1017 = vmatpush1.msra.mxu0 0.0
    %1018 = vmatprep.subr.mxu0 0.0
    %1019 = vmatpush1.msra.mxu0 0.0
    %1020 = vmatprep.subr.mxu0 0.0
    %1021 = vmatpush1.msra.mxu0 0.0
    %1022 = vmatprep.subr.mxu0 0.0
    %1023 = vmatpush1.msra.mxu0 0.0
    %1024 = vmatprep.subr.mxu0 0.0
    %1025 = vmatpush1.msra.mxu0 0.0
    %1026 = vmatprep.subr.mxu0 0.0
    %1027 = vmatpush1.msra.mxu0 0.0
    %1028 = vmatprep.subr.mxu0 0.0
    %1029 = vmatpush1.msra.mxu0 0.0
    %1030 = vmatprep.subr.mxu0 0.0
    %1031 = vmatpush1.msra.mxu0 0.0
    %1032 = vmatprep.subr.mxu0 0.0
    %1033 = vmatpush1.msra.mxu0 0.0
    %1034 = vmatprep.subr.mxu0 0.0
    %1035 = vmatpush1.msra.mxu0 0.0
    %1036 = vmatprep.subr.mxu0 0.0
    %1037 = vmatpush1.msra.mxu0 0.0
    %1038 = vmatprep.subr.mxu0 0.0
    %1039 = vmatpush1.msra.mxu0 0.0
    %1040 = vmatprep.subr.mxu0 0.0
    %1041 = vmatpush1.msra.mxu0 0.0
    %1042 = vmatprep.subr.mxu0 0.0
    %1043 = vmatpush1.msra.mxu0 0.0
    %1044 = vmatprep.subr.mxu0 0.0
    %1045 = vmatpush1.msra.mxu0 0.0
    %1046 = vmatprep.subr.mxu0 0.0
    %1047 = vmatpush1.msra.mxu0 0.0
    %1048 = vmatprep.subr.mxu0 0.0
    %1049 = vmatpush1.msra.mxu0 0.0
    %1050 = vmatprep.subr.mxu0 0.0
    %1051 = vmatpush1.msra.mxu0 0.0
    %1052 = vmatprep.subr.mxu0 0.0
    %1053 = vmatpush1.msra.mxu0 0.0
    %1054 = vmatprep.subr.mxu0 0.0
    %1055 = vmatpush1.msra.mxu0 0.0
    %1056 = vmatprep.subr.mxu0 0.0
    %1057 = vmatpush1.msra.mxu0 0.0
    %1058 = vmatprep.subr.mxu0 0.0
    %1059 = vmatpush1.msra.mxu0 0.0
    %1060 = vmatprep.subr.mxu0 0.0
    %1061 = vmatpush1.msra.mxu0 0.0
    %1062 = vmatprep.mubr.f32.mxu0 0.0
    %1063 = vmatmul.mubr.f32.gmra.mrb[0].mxu0 %v984
    %v1064 = vpop.f32.mrb[0].mxu0
    %v1065 = vadd.f32 0.0, %v1064
    %v1066 = vpop.f32.mrb[0].mxu0
    %v1067 = vadd.f32 0.0, %v1066
    %1068 = vmatprep.mubr.f32.mxu0 0.0
    %1069 = vmatmul.mubr.f32.gmra.mrb[0].mxu0 %v987
    %v1070 = vpop.f32.mrb[0].mxu0
    %v1071 = vadd.f32 0.0, %v1070
    %v1072 = vpop.f32.mrb[0].mxu0
    %v1073 = vadd.f32 0.0, %v1072
    %1074 = vmatprep.mubr.f32.mxu0 0.0
    %1075 = vmatmul.mubr.f32.gmra.mrb[0].mxu0 %v990
    %v1076 = vpop.f32.mrb[0].mxu0
    %v1077 = vadd.f32 0.0, %v1076
    %v1078 = vpop.f32.mrb[0].mxu0
    %v1079 = vadd.f32 0.0, %v1078
    %1080 = vmatprep.mubr.f32.mxu0 0.0
    %1081 = vmatmul.mubr.f32.gmra.mrb[0].mxu0 %v993
    %v1082 = vpop.f32.mrb[0].mxu0
    %v1083 = vadd.f32 0.0, %v1082
    %v1084 = vpop.f32.mrb[0].mxu0
    %v1085 = vadd.f32 0.0, %v1084
    %1086 = vmatprep.mubr.f32.mxu0 0.0
    %1087 = vmatmul.mubr.f32.gmra.mrb[0].mxu0 %v996
    %v1088 = vpop.f32.mrb[0].mxu0
    %v1089 = vadd.f32 0.0, %v1088
    %v1090 = vpop.f32.mrb[0].mxu0
    %v1091 = vadd.f32 0.0, %v1090
    %1092 = vdwg.mxu0
    %v1093 = vadd.f32 %v965, %v1065
    %v1094 = vadd.f32 %v966, %v1067
    %v1095 = vadd.f32 %v967, %v1071
    %v1096 = vadd.f32 %v968, %v1073
    %v1097 = vadd.f32 %v969, %v1077
    %v1098 = vadd.f32 %v970, %v1079
    %v1099 = vadd.f32 %v971, %v1083
    %v1100 = vadd.f32 %v972, %v1085
    %v1101 = vadd.f32 %v973, %v1089
    %v1102 = vadd.f32 %v974, %v1091
    %v1103 = vld [vmem:[%s10] sm:$0x3]
    %v1105 = vlaneseq
    %v1106 = vshrl.u32 %v1105, 7
    %v1107 = vsub.s32 0, %v1106
    %v1108 = vrot.slane %v1103, %v1107
    %v1109 = vlaneseq
    %v1110 = vshrl.u32 %v1109, 7
    %v1111 = vsub.s32 1, %v1110
    %v1112 = vrot.slane %v1103, %v1111
    %v1115 = vadd.f32 %v1093, %v1108
    %v1116 = vadd.f32 %v1094, %v1112
    %v1117 = vadd.f32 %v1095, %v1108
    %v1118 = vadd.f32 %v1096, %v1112
    %v1119 = vadd.f32 %v1097, %v1108
    %v1120 = vadd.f32 %v1098, %v1112
    %v1121 = vadd.f32 %v1099, %v1108
    %v1122 = vadd.f32 %v1100, %v1112
    %v1123 = vadd.f32 %v1101, %v1108
    %v1124 = vadd.f32 %v1102, %v1112
    %v1125 = vmax.f32 %v1115, 0.0
    %v1126 = vmax.f32 %v1116, 0.0
    %v1127 = vmax.f32 %v1117, 0.0
    %v1128 = vmax.f32 %v1118, 0.0
    %v1129 = vmax.f32 %v1119, 0.0
    %v1130 = vmax.f32 %v1120, 0.0
    %v1131 = vmax.f32 %v1121, 0.0
    %v1132 = vmax.f32 %v1122, 0.0
    %v1133 = vmax.f32 %v1123, 0.0
    %v1134 = vmax.f32 %v1124, 0.0
    %v1135 = vld [vmem:[#allocation11] sm:$0xff]
    %v1136 = vld [vmem:[#allocation11 + $0x8] sm:$0xff]
    %v1137 = vld [vmem:[#allocation11 + $0x10] sm:$0xff]
    %v1138 = vld [vmem:[#allocation11 + $0x18] sm:$0xff]
    %v1139 = vld [vmem:[#allocation11 + $0x20] sm:$0xff]
    %v1140 = vld [vmem:[#allocation11 + $0x28] sm:$0xff]
    %v1141 = vld [vmem:[#allocation11 + $0x30] sm:$0xff]
    %v1142 = vld [vmem:[#allocation11 + $0x38] sm:$0xff]
    %v1143 = vld [vmem:[#allocation11 + $0x40] sm:$0xff]
    %v1144 = vld [vmem:[#allocation11 + $0x48] sm:$0xff]
    %v1145 = vld [vmem:[#allocation11 + $0x50] sm:$0xff]
    %v1146 = vld [vmem:[#allocation11 + $0x58] sm:$0xff]
    %v1147 = vld [vmem:[#allocation11 + $0x60] sm:$0xff]
    %v1148 = vld [vmem:[#allocation11 + $0x68] sm:$0xff]
    %v1149 = vld [vmem:[#allocation11 + $0x70] sm:$0xff]
    %v1150 = vld [vmem:[#allocation11 + $0x78] sm:$0xff]
    %v1151 = vld [vmem:[#allocation11 + $0x80] sm:$0xff]
    %v1152 = vld [vmem:[#allocation11 + $0x88] sm:$0xff]
    %v1153 = vld [vmem:[#allocation11 + $0x90] sm:$0xff]
    %v1154 = vld [vmem:[#allocation11 + $0x98] sm:$0xff]
    %v1155 = vld [vmem:[#allocation11 + $0xa0] sm:$0xff]
    %v1156 = vld [vmem:[#allocation11 + $0xa8] sm:$0xff]
    %v1157 = vld [vmem:[#allocation11 + $0xb0] sm:$0xff]
    %v1158 = vld [vmem:[#allocation11 + $0xb8] sm:$0xff]
    %v1159 = vld [vmem:[#allocation11 + $0xc0] sm:$0xff]
    %v1160 = vld [vmem:[#allocation11 + $0xc8] sm:$0xff]
    %v1161 = vld [vmem:[#allocation11 + $0xd0] sm:$0xff]
    %v1162 = vld [vmem:[#allocation11 + $0xd8] sm:$0xff]
    %v1163 = vld [vmem:[#allocation11 + $0xe0] sm:$0xff]
    %v1164 = vld [vmem:[#allocation11 + $0xe8] sm:$0xff]
    %v1165 = vld [vmem:[#allocation11 + $0xf0] sm:$0xff]
    %v1166 = vld [vmem:[#allocation11 + $0xf8] sm:$0xff]
    %v1167 = vld [vmem:[%s12] sm:$0x1]
    %v1169 = vlaneseq
    %v1170 = vshrl.u32 %v1169, 7
    %v1171 = vsub.s32 0, %v1170
    %v1172 = vrot.slane %v1167, %v1171
    %1174 = vmatprep.subr.mxu0 0.0
    %1175 = vmatpush1.msra.mxu0 %v1135
    %1176 = vmatprep.subr.mxu0 0.0
    %1177 = vmatpush1.msra.mxu0 %v1136
    %1178 = vmatprep.subr.mxu0 0.0
    %1179 = vmatpush1.msra.mxu0 %v1137
    %1180 = vmatprep.subr.mxu0 0.0
    %1181 = vmatpush1.msra.mxu0 %v1138
    %1182 = vmatprep.subr.mxu0 0.0
    %1183 = vmatpush1.msra.mxu0 %v1139
    %1184 = vmatprep.subr.mxu0 0.0
    %1185 = vmatpush1.msra.mxu0 %v1140
    %1186 = vmatprep.subr.mxu0 0.0
    %1187 = vmatpush1.msra.mxu0 %v1141
    %1188 = vmatprep.subr.mxu0 0.0
    %1189 = vmatpush1.msra.mxu0 %v1142
    %1190 = vmatprep.subr.mxu0 0.0
    %1191 = vmatpush1.msra.mxu0 %v1143
    %1192 = vmatprep.subr.mxu0 0.0
    %1193 = vmatpush1.msra.mxu0 %v1144
    %1194 = vmatprep.subr.mxu0 0.0
    %1195 = vmatpush1.msra.mxu0 %v1145
    %1196 = vmatprep.subr.mxu0 0.0
    %1197 = vmatpush1.msra.mxu0 %v1146
    %1198 = vmatprep.subr.mxu0 0.0
    %1199 = vmatpush1.msra.mxu0 %v1147
    %1200 = vmatprep.subr.mxu0 0.0
    %1201 = vmatpush1.msra.mxu0 %v1148
    %1202 = vmatprep.subr.mxu0 0.0
    %1203 = vmatpush1.msra.mxu0 %v1149
    %1204 = vmatprep.subr.mxu0 0.0
    %1205 = vmatpush1.msra.mxu0 %v1150
    %1206 = vmatprep.subr.mxu0 0.0
    %1207 = vmatpush1.msra.mxu0 %v1151
    %1208 = vmatprep.subr.mxu0 0.0
    %1209 = vmatpush1.msra.mxu0 %v1152
    %1210 = vmatprep.subr.mxu0 0.0
    %1211 = vmatpush1.msra.mxu0 %v1153
    %1212 = vmatprep.subr.mxu0 0.0
    %1213 = vmatpush1.msra.mxu0 %v1154
    %1214 = vmatprep.subr.mxu0 0.0
    %1215 = vmatpush1.msra.mxu0 %v1155
    %1216 = vmatprep.subr.mxu0 0.0
    %1217 = vmatpush1.msra.mxu0 %v1156
    %1218 = vmatprep.subr.mxu0 0.0
    %1219 = vmatpush1.msra.mxu0 %v1157
    %1220 = vmatprep.subr.mxu0 0.0
    %1221 = vmatpush1.msra.mxu0 %v1158
    %1222 = vmatprep.subr.mxu0 0.0
    %1223 = vmatpush1.msra.mxu0 %v1159
    %1224 = vmatprep.subr.mxu0 0.0
    %1225 = vmatpush1.msra.mxu0 %v1160
    %1226 = vmatprep.subr.mxu0 0.0
    %1227 = vmatpush1.msra.mxu0 %v1161
    %1228 = vmatprep.subr.mxu0 0.0
    %1229 = vmatpush1.msra.mxu0 %v1162
    %1230 = vmatprep.subr.mxu0 0.0
    %1231 = vmatpush1.msra.mxu0 %v1163
    %1232 = vmatprep.subr.mxu0 0.0
    %1233 = vmatpush1.msra.mxu0 %v1164
    %1234 = vmatprep.subr.mxu0 0.0
    %1235 = vmatpush1.msra.mxu0 %v1165
    %1236 = vmatprep.subr.mxu0 0.0
    %1237 = vmatpush1.msra.mxu0 %v1166
    %1238 = vmatprep.mubr.f32.mxu0 %v1126
    %1239 = vmatmul.mubr.f32.gmra.mrb[0].mxu0 %v1125
    %v1240 = vpop.f32.mrb[0].mxu0
    %v1241 = vadd.f32 %v1172, %v1240
    %v1242 = vpop.f32.mrb[0].mxu0
    %1243 = vmatprep.mubr.f32.mxu0 %v1128
    %1244 = vmatmul.mubr.f32.gmra.mrb[0].mxu0 %v1127
    %v1245 = vpop.f32.mrb[0].mxu0
    %v1246 = vadd.f32 %v1172, %v1245
    %v1247 = vpop.f32.mrb[0].mxu0
    %1248 = vmatprep.mubr.f32.mxu0 %v1130
    %1249 = vmatmul.mubr.f32.gmra.mrb[0].mxu0 %v1129
    %v1250 = vpop.f32.mrb[0].mxu0
    %v1251 = vadd.f32 %v1172, %v1250
    %v1252 = vpop.f32.mrb[0].mxu0
    %1253 = vmatprep.mubr.f32.mxu0 %v1132
    %1254 = vmatmul.mubr.f32.gmra.mrb[0].mxu0 %v1131
    %v1255 = vpop.f32.mrb[0].mxu0
    %v1256 = vadd.f32 %v1172, %v1255
    %v1257 = vpop.f32.mrb[0].mxu0
    %1258 = vmatprep.mubr.f32.mxu0 %v1134
    %1259 = vmatmul.mubr.f32.gmra.mrb[0].mxu0 %v1133
    %v1260 = vpop.f32.mrb[0].mxu0
    %v1261 = vadd.f32 %v1172, %v1260
    %v1262 = vpop.f32.mrb[0].mxu0
    %1263 = vdwg.mxu0
    %v1264 = vxor.u32 %v1241, 2147483648
    %v1265 = vxor.u32 %v1246, 2147483648
    %v1266 = vxor.u32 %v1251, 2147483648
    %v1267 = vxor.u32 %v1256, 2147483648
    %v1268 = vxor.u32 %v1261, 2147483648
    %v1269 = vmul.f32 %v1264, 1.442695
    %v1270 = vpow.pop %v1269
    %v1271 = vmul.f32 %v1265, 1.442695
    %v1272 = vpow.pop %v1271
    %v1273 = vmul.f32 %v1266, 1.442695
    %v1274 = vpow.pop %v1273
    %v1275 = vmul.f32 %v1267, 1.442695
    %v1276 = vpow.pop %v1275
    %v1277 = vmul.f32 %v1268, 1.442695
    %v1278 = vpow.pop %v1277
    %v1279 = vadd.f32 %v1270, 1.0
    %v1280 = vadd.f32 %v1272, 1.0
    %v1281 = vadd.f32 %v1274, 1.0
    %v1282 = vadd.f32 %v1276, 1.0
    %v1283 = vadd.f32 %v1278, 1.0
    %v1284 = vrcp.pop %v1279
    %v1285 = vmul.f32 1.0, %v1284
    %v1286 = vrcp.pop %v1280
    %v1287 = vmul.f32 1.0, %v1286
    %v1288 = vrcp.pop %v1281
    %v1289 = vmul.f32 1.0, %v1288
    %v1290 = vrcp.pop %v1282
    %v1291 = vmul.f32 1.0, %v1290
    %v1292 = vrcp.pop %v1283
    %v1293 = vmul.f32 1.0, %v1292
    %v1294 = vmul.f32 %v942, %v1285
    %v1295 = vmul.f32 %v947, %v1287
    %v1296 = vmul.f32 %v952, %v1289
    %v1297 = vmul.f32 %v957, %v1291
    %v1298 = vmul.f32 %v962, %v1293
    %1299 = vst [vmem:[#allocation13] sm:$0xff] %v1294
    %1300 = vst [vmem:[#allocation13 + $0x8] sm:$0xff] %v1295
    %1301 = vst [vmem:[#allocation13 + $0x10] sm:$0xff] %v1296
    %1302 = vst [vmem:[#allocation13 + $0x18] sm:$0xff] %v1297
    %1303 = vst [vmem:[#allocation13 + $0x20] sm:$0x3f] %v1298
    // Predicated region
    $region78: #{tpu_custom_call.1} parent=1 // pred_check
      _
    $region79: #{tpu_custom_call.1} parent=1 // pred_check_branch
      %1305 = sbr.rel (0) target = $region81
    $region80: #{tpu_custom_call.1} parent=1 // pred_region
      %s1307 = ssub.s32 640, 640
      %1308 = vsyncadd [#allocation4], %s1307
      %s1309 = sshll.u32 [#allocation13], 4
      %s1310 = int_to_ptr.vmem [resolvable:$true] %s1309
      %1315 = dma.vmem_to_hbm [thread:$0]  %s1310, 640, %s13, [#allocation4], 128, 128, 8
    $region81: #{tpu_custom_call.1} parent=1 // pred_fallthru
      _
    // Predicated region
    $region82: #{tpu_custom_call.1} parent=1 // pred_check
      _
    $region83: #{tpu_custom_call.1} parent=1 // pred_check_branch
      %1317 = sbr.rel (0) target = $region85
    $region84: #{tpu_custom_call.1} parent=1 // pred_region
      %1318 = dma.done [#allocation4], 640
    $region85: #{tpu_custom_call.1} parent=1 // pred_fallthru
      _
    %1319 = vsyncpa [#allocation3], 1
    %1320 = vsyncpa [#allocation6], 1
    %1321 = vsyncpa [#allocation9], 1
    %1322 = vsyncpa [#allocation12], 1
    %1323 = vsyncpa [#allocation4], 1

</llo_original>
